<compile_context>
chip_gen: v7x
topology: tpu7x:2x2x1
jax: 0.10.0
libtpu: 0.0.40
codegen_flags: <defaults>
</compile_context>

<pallas_src>
import math
from functools import partial

import jax
import jax.numpy as jnp
from jax import lax
from jax.experimental import pallas as pl
from jax.experimental.pallas import tpu as pltpu


def _round_up(x, m):
    return ((x + m - 1) // m) * m


def _vmem_capacity_bytes():
    """Physical per-core VMEM (v5e/v6e: 128 MiB, v7x: 64 MiB); conservative fallback."""
    try:
        info = pltpu.get_tpu_info()
        cap = getattr(info, "vmem_capacity_bytes", None)
        if cap:
            return int(cap)
    except Exception:
        pass
    return 64 * 1024 * 1024


def _fourier_pe_kernel(pos_ref, wc2_ref, phase_ref, w1_ref, b1_ref, w2_ref, b2_ref,
                       out_ref, h_ref, *, num_dims, compute_dtype):
    # pos_ref  : (TM, num_dims)              tile of flattened positions
    # wc2_ref  : (num_dims, fourier_dim)     [fourier_coeff.weight^T | same]  (fused sin/cos)
    # phase_ref: (1, fourier_dim)            [0...0 | pi/2...pi/2]
    # w1_ref   : (fourier_dim, hidden_pad)   fourier_to_hidden.weight^T * 1/sqrt(fd)
    # b1_ref   : (1, hidden_pad)             fourier_to_hidden.bias (zero-padded, f32)
    # w2_ref   : (hidden_pad, TN_E)          hidden_to_embed.weight^T tile (zero-padded)
    # b2_ref   : (1, TN_E)                   hidden_to_embed.bias tile (zero-padded, f32)
    # out_ref  : (TM, TN_E)
    # h_ref    : (TM, hidden_pad)            VMEM scratch: GELU(hidden) cached across embed tiles
    inv_sqrt2 = 1.0 / math.sqrt(2.0)

    @pl.when(pl.program_id(1) == 0)
    def _compute_hidden():
        pos = pos_ref[...].astype(jnp.float32)
        wc2 = wc2_ref[...].astype(jnp.float32)
        # Fourier projection on the VPU (K = num_dims is tiny; an MXU matmul would
        # waste the systolic K dimension).
        proj = pos[:, 0:1] * wc2[0:1, :]
        for d in range(1, num_dims):
            proj = proj + pos[:, d:d + 1] * wc2[d:d + 1, :]
        # cos(x) = sin(x + pi/2): ONE transcendental pass over [sin | cos] features.
        feats = jnp.sin(proj + phase_ref[...])
        # fourier_to_hidden (1/sqrt(fourier_dim) is folded into w1 host-side).
        h = (jnp.dot(feats.astype(compute_dtype), w1_ref[...],
                     preferred_element_type=jnp.float32)
             + b1_ref[...])
        # Exact (erf) GELU in f32 — matches torch.nn.GELU() default semantics.
        # (A bf16 / tanh-approx GELU would shave VALU work on v6e/v7x but changes numerics.)
        h = 0.5 * h * (1.0 + lax.erf(h * inv_sqrt2))
        h_ref[...] = h.astype(h_ref.dtype)

    # hidden_to_embed for this embed tile (hidden activations reused from scratch).
    out = (jnp.dot(h_ref[...], w2_ref[...], preferred_element_type=jnp.float32)
           + b2_ref[...])
    out_ref[...] = out.astype(out_ref.dtype)


def multi_dim_fourier_pe(pos, wc, w1, b1, w2, b2, *, fourier_dim,
                         tile_rows=1024, compute_dtype=jnp.float32, out_dtype=None):
    """pos: (bsz, seq_len, num_dims) -> (bsz, seq_len, embed_dim).

    wc: (sentinel, num_dims)   fourier_coeff.weight (no bias)
    w1: (hidden, fourier_dim)  fourier_to_hidden.weight,  b1: (hidden,)
    w2: (embed, hidden)        hidden_to_embed.weight,    b2: (embed,)
    compute_dtype: f32 (exact, default) or bf16 (MXU-native fast path).
    out_dtype:     output dtype (defaults to pos.dtype).
    """
    bsz, seq_len, num_dims = pos.shape
    sentinel = wc.shape[0]
    cos_width = fourier_dim - sentinel   # == sentinel for even fourier_dim (the torch
    # module is only well-formed for even fourier_dim; odd handled here exactly).
    hidden_dim = w1.shape[0]
    embed_dim = w2.shape[0]
    out_dtype = pos.dtype if out_dtype is None else out_dtype

    n = bsz * seq_len
    pos2d = pos.reshape(n, num_dims)

    f32 = jnp.float32
    hidden_pad = _round_up(hidden_dim, 128)
    embed_pad = _round_up(embed_dim, 128)
    scale = 1.0 / math.sqrt(fourier_dim)

    # ---- host-side parameter prep (zero-padding is mathematically exact) -----
    # Fused sin/cos: cos(x) = sin(x + pi/2) -> wc2 = [wc | wc] plus a phase row.
    wc2 = jnp.zeros((num_dims, fourier_dim), f32)
    wc2 = wc2.at[:, :sentinel].set(wc.T.astype(f32))
    wc2 = wc2.at[:, sentinel:].set(wc[:cos_width].T.astype(f32))
    phase = jnp.zeros((1, fourier_dim), f32).at[0, sentinel:].set(math.pi / 2)

    w1_t = jnp.zeros((fourier_dim, hidden_pad), f32)
    w1_t = w1_t.at[:, :hidden_dim].set(w1.T.astype(f32) * scale)
    w1_t = w1_t.astype(compute_dtype)
    b1_p = jnp.zeros((1, hidden_pad), f32).at[0, :hidden_dim].set(b1.astype(f32))
    w2_p = jnp.zeros((hidden_pad, embed_pad), f32)
    w2_p = w2_p.at[:hidden_dim, :embed_dim].set(w2.T.astype(f32))
    w2_p = w2_p.astype(compute_dtype)
    b2_p = jnp.zeros((1, embed_pad), f32).at[0, :embed_dim].set(b2.astype(f32))

    # ---- generation-aware VMEM budget (physical, padded buffer sizes) --------
    pos_isz = jnp.dtype(pos.dtype).itemsize
    out_isz = jnp.dtype(out_dtype).itemsize
    ws = jnp.dtype(compute_dtype).itemsize
    sub_of = lambda isz: {4: 8, 2: 16, 1: 32}.get(isz, 8)
    min_sub = max(sub_of(pos_isz), sub_of(out_isz))

    vmem_cap = _vmem_capacity_bytes()                       # 128 MiB v5e/v6e, 64 MiB v7x
    vmem_limit = min(vmem_cap * 3 // 4, 100 * 1024 * 1024)  # ~48 MiB v7x, ~96 MiB v5e/v6e
    budget = vmem_limit - (2 << 20)                         # headroom for internal scratch

    f_lanes = _round_up(fourier_dim, 128)
    nd_sub = _round_up(num_dims, 8)
    f_sub = _round_up(fourier_dim, sub_of(ws))
    fixed_weight_bytes = (4 * nd_sub * f_lanes          # wc2   (f32)
                          + 4 * 8 * f_lanes             # phase (f32, 8-sublane padded)
                          + ws * f_sub * hidden_pad     # w1 (scaled, unsplit)
                          + 4 * 8 * hidden_pad)         # b1

    def _w2_bytes(tn):
        bufs = 1 if tn >= embed_pad else 2               # single-buffered when invariant
        return bufs * (ws * hidden_pad * tn + 4 * 8 * tn)

    # Tile the embed axis only when resident weights would eat > ~1/4 of the budget.
    tn_e = embed_pad
    while tn_e > 128 and fixed_weight_bytes + _w2_bytes(tn_e) > budget // 4:
        tn_e = max(128, _round_up(tn_e // 2, 128))
    n_e = pl.cdiv(embed_pad, tn_e)

    # Row-tile sizing: big, MXU/sublane aligned, VMEM-budgeted.
    row_bytes = (2 * pos_isz * 128                        # pos tile (lane-padded), double-buffered
                 + 2 * out_isz * tn_e                     # out tile, double-buffered
                 + ws * hidden_pad                        # hidden scratch
                 + 4 * (2 * f_lanes + 2 * hidden_pad + 2 * tn_e))   # f32 temporaries
    avail = budget - fixed_weight_bytes - _w2_bytes(tn_e)
    tm = min(tile_rows, max(min_sub, avail // row_bytes), _round_up(n, min_sub))

    # Guarantee >= 2 row tiles when possible so v7x's 2nd TensorCore gets work.
    if n >= 2 * min_sub:
        if n >= 256:
            tm = min(tm, max(128, (n // 256) * 128))      # round_down(n/2, 128)
        else:
            tm = min(tm, _round_up((n + 1) // 2, min_sub))
    if tm >= 128:
        tm = (tm // 128) * 128                            # MXU-aligned M
    else:
        tm = max(min_sub, (tm // min_sub) * min_sub)
    n_rows = pl.cdiv(n, tm)                               # ragged last block is masked by Pallas

    cost = pl.CostEstimate(
        flops=2 * n * (num_dims * fourier_dim + fourier_dim * hidden_pad
                       + hidden_pad * embed_pad),
        transcendentals=n * (fourier_dim + hidden_pad),
        bytes_accessed=(pos_isz * n * num_dims + out_isz * n * embed_pad
                        + fixed_weight_bytes + ws * hidden_pad * embed_pad),
    )

    def _spec(shape, index_map, mode):
        if mode is None:
            return pl.BlockSpec(shape, index_map)
        return pl.BlockSpec(shape, index_map, pipeline_mode=mode)

    def _invoke(weight_mode):
        w2_mode = weight_mode if n_e == 1 else None       # stream w2 only when embed is tiled
        in_specs = [
            pl.BlockSpec((tm, num_dims), lambda i, j: (i, 0)),
            _spec((num_dims, fourier_dim), lambda i, j: (0, 0), weight_mode),
            _spec((1, fourier_dim), lambda i, j: (0, 0), weight_mode),
            _spec((fourier_dim, hidden_pad), lambda i, j: (0, 0), weight_mode),
            _spec((1, hidden_pad), lambda i, j: (0, 0), weight_mode),
            _spec((hidden_pad, tn_e), lambda i, j: (0, j), w2_mode),
            _spec((1, tn_e), lambda i, j: (0, j), w2_mode),
        ]
        return pl.pallas_call(
            partial(_fourier_pe_kernel, num_dims=num_dims, compute_dtype=compute_dtype),
            out_shape=jax.ShapeDtypeStruct((n, embed_pad), out_dtype),
            grid_spec=pltpu.PrefetchScalarGridSpec(
                num_scalar_prefetch=0,
                grid=(n_rows, n_e),
                in_specs=in_specs,
                out_specs=pl.BlockSpec((tm, tn_e), lambda i, j: (i, j)),
                scratch_shapes=[pltpu.VMEM((tm, hidden_pad), compute_dtype)],
            ),
            compiler_params=pltpu.CompilerParams(
                dimension_semantics=("parallel", "arbitrary"),
                vmem_limit_bytes=int(vmem_limit)),
            cost_estimate=cost,
        )(pos2d, wc2, phase, w1_t, b1_p, w2_p, b2_p)

    try:
        out2d = _invoke(pl.Buffered(buffer_count=1))      # single-buffer invariant weights
    except Exception:
        out2d = _invoke(None)                             # fallback: default double-buffering

    if embed_pad != embed_dim:
        out2d = out2d[:, :embed_dim]
    return out2d.reshape(bsz, seq_len, embed_dim)


if __name__ == "__main__":
    # module config (small, consistent with the forward pass)
    fourier_dim = 32          # even -> sentinel = 16
    hidden_dim = 32
    model_dim = 32
    num_dims = 2
    sentinel = fourier_dim // 2

    key = jax.random.PRNGKey(0)
    k_pos, k_wc, k_w1, k_b1, k_w2, k_b2, k_pos2 = jax.random.split(key, 7)

    # deterministic synthetic parameters (PyTorch Linear-style uniform ranges)
    def uinit(k, shape, fan_in):
        b = 1.0 / math.sqrt(fan_in)
        return jax.random.uniform(k, shape, minval=-b, maxval=b, dtype=jnp.float32)

    # NOTE: the torch module re-randomizes fourier_coeff every forward; here it is an
    # explicit parameter `wc` (one fixed random draw).
    wc = uinit(k_wc, (sentinel, num_dims), num_dims)          # fourier_coeff.weight
    w1 = uinit(k_w1, (hidden_dim, fourier_dim), fourier_dim)  # fourier_to_hidden.weight
    b1 = uinit(k_b1, (hidden_dim,), fourier_dim)              # fourier_to_hidden.bias
    w2 = uinit(k_w2, (model_dim, hidden_dim), hidden_dim)     # hidden_to_embed.weight
    b2 = uinit(k_b2, (model_dim,), hidden_dim)                # hidden_to_embed.bias

    def reference(p):   # pure-JAX reference matching the torch forward
        proj = p @ wc.T
        feats = jnp.concatenate([jnp.sin(proj), jnp.cos(proj)], axis=-1) / math.sqrt(fourier_dim)
        h = feats @ w1.T + b1
        h = 0.5 * h * (1.0 + lax.erf(h / math.sqrt(2.0)))
        return h @ w2.T + b2

    # 1) small even shape — exact f32 path
    pos = jax.random.uniform(k_pos, (2, 8, num_dims), dtype=jnp.float32)
    out = jax.block_until_ready(
        multi_dim_fourier_pe(pos, wc, w1, b1, w2, b2, fourier_dim=fourier_dim))
    assert out.shape == (2, 8, model_dim)
    assert jnp.allclose(out, reference(pos), atol=1e-5, rtol=1e-5)

    # 2) ragged row count — exercises the masked last row tile (no pad/slice round trip)
    pos_r = jax.random.uniform(k_pos2, (3, 57, num_dims), dtype=jnp.float32)
    out_r = jax.block_until_ready(
        multi_dim_fourier_pe(pos_r, wc, w1, b1, w2, b2, fourier_dim=fourier_dim))
    assert out_r.shape == (3, 57, model_dim)
    assert jnp.allclose(out_r, reference(pos_r), atol=1e-5, rtol=1e-5)

    # 3) optional bf16 MXU path + bf16 output (looser numerics, same structure)
    out_bf = jax.block_until_ready(
        multi_dim_fourier_pe(pos, wc, w1, b1, w2, b2, fourier_dim=fourier_dim,
                             compute_dtype=jnp.bfloat16, out_dtype=jnp.bfloat16))
    assert out_bf.dtype == jnp.bfloat16
    assert jnp.allclose(out_bf.astype(jnp.float32), reference(pos), atol=5e-2, rtol=5e-2)

    print("KERNEL_OK")
</pallas_src>

<mosaic_0001>
module attributes {stable_mosaic.version = 11 : i64} {
  func.func @_fourier_pe_kernel(%arg0: i32, %arg1: i32, %arg2: memref<8x2xf32, #tpu.memory_space<vmem>>, %arg3: memref<2x32xf32, #tpu.memory_space<vmem>>, %arg4: memref<1x32xf32, #tpu.memory_space<vmem>>, %arg5: memref<32x128xf32, #tpu.memory_space<vmem>>, %arg6: memref<1x128xf32, #tpu.memory_space<vmem>>, %arg7: memref<128x128xf32, #tpu.memory_space<vmem>>, %arg8: memref<1x128xf32, #tpu.memory_space<vmem>>, %arg9: memref<8x128xf32, #tpu.memory_space<vmem>>, %arg10: memref<8x128xf32, #tpu.memory_space<vmem>>) attributes {dimension_semantics = [#tpu.dimension_semantics<parallel>, #tpu.dimension_semantics<arbitrary>], iteration_bounds = array<i64: 2, 1>, scalar_prefetch = 0 : i64, scratch_operands = 1 : i64, tpu.core_type = #tpu.core_type<tc>, window_params = [{transform_indices = @transform_0, window_bounds = array<i64: 8, 2>}, {pipeline_mode = #tpu.pipeline_mode<synchronous>, transform_indices = @transform_1, window_bounds = array<i64: 2, 32>}, {pipeline_mode = #tpu.pipeline_mode<synchronous>, transform_indices = @transform_2, window_bounds = array<i64: 1, 32>}, {pipeline_mode = #tpu.pipeline_mode<synchronous>, transform_indices = @transform_3, window_bounds = array<i64: 32, 128>}, {pipeline_mode = #tpu.pipeline_mode<synchronous>, transform_indices = @transform_4, window_bounds = array<i64: 1, 128>}, {pipeline_mode = #tpu.pipeline_mode<synchronous>, transform_indices = @transform_5, window_bounds = array<i64: 128, 128>}, {pipeline_mode = #tpu.pipeline_mode<synchronous>, transform_indices = @transform_6, window_bounds = array<i64: 1, 128>}, {transform_indices = @transform_7, window_bounds = array<i64: 8, 128>}]} {
    %c0_i32 = arith.constant 0 : i32
    %0 = arith.cmpi eq, %arg1, %c0_i32 : i32
    %1 = arith.extui %0 : i1 to i32
    %c0_i32_0 = arith.constant 0 : i32
    %2 = arith.cmpi ne, %1, %c0_i32_0 : i32
    scf.if %2 {
      %c0_8 = arith.constant 0 : index
      %c0_9 = arith.constant 0 : index
      %10 = vector.load %arg2[%c0_8, %c0_9] : memref<8x2xf32, #tpu.memory_space<vmem>>, vector<8x2xf32>
      %c0_10 = arith.constant 0 : index
      %c0_11 = arith.constant 0 : index
      %11 = vector.load %arg3[%c0_10, %c0_11] : memref<2x32xf32, #tpu.memory_space<vmem>>, vector<2x32xf32>
      %12 = vector.extract_strided_slice %10 {offsets = [0, 0], sizes = [8, 1], strides = [1, 1]} : vector<8x2xf32> to vector<8x1xf32>
      %13 = vector.extract_strided_slice %11 {offsets = [0, 0], sizes = [1, 32], strides = [1, 1]} : vector<2x32xf32> to vector<1x32xf32>
      %14 = vector.broadcast %12 : vector<8x1xf32> to vector<8x32xf32>
      %15 = vector.broadcast %13 : vector<1x32xf32> to vector<8x32xf32>
      %16 = arith.mulf %14, %15 : vector<8x32xf32>
      %17 = vector.extract_strided_slice %10 {offsets = [0, 1], sizes = [8, 1], strides = [1, 1]} : vector<8x2xf32> to vector<8x1xf32>
      %18 = vector.extract_strided_slice %11 {offsets = [1, 0], sizes = [1, 32], strides = [1, 1]} : vector<2x32xf32> to vector<1x32xf32>
      %19 = vector.broadcast %17 : vector<8x1xf32> to vector<8x32xf32>
      %20 = vector.broadcast %18 : vector<1x32xf32> to vector<8x32xf32>
      %21 = arith.mulf %19, %20 : vector<8x32xf32>
      %22 = arith.addf %16, %21 : vector<8x32xf32>
      %c0_12 = arith.constant 0 : index
      %c0_13 = arith.constant 0 : index
      %23 = vector.load %arg4[%c0_12, %c0_13] : memref<1x32xf32, #tpu.memory_space<vmem>>, vector<1x32xf32>
      %24 = vector.broadcast %23 : vector<1x32xf32> to vector<8x32xf32>
      %25 = arith.addf %22, %24 : vector<8x32xf32>
      %26 = math.sin %25 : vector<8x32xf32>
      %c0_14 = arith.constant 0 : index
      %c0_15 = arith.constant 0 : index
      %27 = vector.load %arg5[%c0_14, %c0_15] : memref<32x128xf32, #tpu.memory_space<vmem>>, vector<32x128xf32>
      %cst_16 = arith.constant dense<0.000000e+00> : vector<8x128xf32>
      %28 = tpu.matmul %26, %27, %cst_16 {dimension_numbers = #tpu.dot_dimension_numbers<[1], [0], [0], [1], [0, 0, 1, 1], [], []>} : vector<8x32xf32>, vector<32x128xf32>, vector<8x128xf32> -> vector<8x128xf32>
      %c0_17 = arith.constant 0 : index
      %c0_18 = arith.constant 0 : index
      %29 = vector.load %arg6[%c0_17, %c0_18] : memref<1x128xf32, #tpu.memory_space<vmem>>, vector<1x128xf32>
      %30 = vector.broadcast %29 : vector<1x128xf32> to vector<8x128xf32>
      %31 = arith.addf %28, %30 : vector<8x128xf32>
      %cst_19 = arith.constant 5.000000e-01 : f32
      %32 = vector.broadcast %cst_19 : f32 to vector<8x128xf32>
      %33 = arith.mulf %32, %31 : vector<8x128xf32>
      %cst_20 = arith.constant 0.707106769 : f32
      %34 = vector.broadcast %cst_20 : f32 to vector<8x128xf32>
      %35 = arith.mulf %31, %34 : vector<8x128xf32>
      %36 = math.erf %35 : vector<8x128xf32>
      %cst_21 = arith.constant 1.000000e+00 : f32
      %37 = vector.broadcast %cst_21 : f32 to vector<8x128xf32>
      %38 = arith.addf %37, %36 : vector<8x128xf32>
      %39 = arith.mulf %33, %38 : vector<8x128xf32>
      %c0_22 = arith.constant 0 : index
      %c0_23 = arith.constant 0 : index
      %40 = vector.load %arg10[%c0_22, %c0_23] : memref<8x128xf32, #tpu.memory_space<vmem>>, vector<8x128xf32>
      tpu.vector_store %arg10[%c0_22, %c0_23], %39 {strides = array<i32>} : memref<8x128xf32, #tpu.memory_space<vmem>>, vector<8x128xf32>,
    } else {
    }
    %c0 = arith.constant 0 : index
    %c0_1 = arith.constant 0 : index
    %3 = vector.load %arg10[%c0, %c0_1] : memref<8x128xf32, #tpu.memory_space<vmem>>, vector<8x128xf32>
    %c0_2 = arith.constant 0 : index
    %c0_3 = arith.constant 0 : index
    %4 = vector.load %arg7[%c0_2, %c0_3] : memref<128x128xf32, #tpu.memory_space<vmem>>, vector<128x128xf32>
    %cst = arith.constant dense<0.000000e+00> : vector<8x128xf32>
    %5 = tpu.matmul %3, %4, %cst {dimension_numbers = #tpu.dot_dimension_numbers<[1], [0], [0], [1], [0, 0, 1, 1], [], []>} : vector<8x128xf32>, vector<128x128xf32>, vector<8x128xf32> -> vector<8x128xf32>
    %c0_4 = arith.constant 0 : index
    %c0_5 = arith.constant 0 : index
    %6 = vector.load %arg8[%c0_4, %c0_5] : memref<1x128xf32, #tpu.memory_space<vmem>>, vector<1x128xf32>
    %7 = vector.broadcast %6 : vector<1x128xf32> to vector<8x128xf32>
    %8 = arith.addf %5, %7 : vector<8x128xf32>
    %c0_6 = arith.constant 0 : index
    %c0_7 = arith.constant 0 : index
    %9 = vector.load %arg9[%c0_6, %c0_7] : memref<8x128xf32, #tpu.memory_space<vmem>>, vector<8x128xf32>
    tpu.vector_store %arg9[%c0_6, %c0_7], %8 {strides = array<i32>} : memref<8x128xf32, #tpu.memory_space<vmem>>, vector<8x128xf32>,
    return
  }
  func.func @transform_0(%arg0: i32, %arg1: i32) -> (i32, i32) {
    %c0_i32 = arith.constant 0 : i32
    %c0_i32_0 = arith.constant 0 : i32
    return %arg0, %c0_i32 : i32, i32
  }
  func.func @transform_1(%arg0: i32, %arg1: i32) -> (i32, i32) {
    %c0_i32 = arith.constant 0 : i32
    %c0_i32_0 = arith.constant 0 : i32
    %c0_i32_1 = arith.constant 0 : i32
    return %c0_i32, %c0_i32_0 : i32, i32
  }
  func.func @transform_2(%arg0: i32, %arg1: i32) -> (i32, i32) {
    %c0_i32 = arith.constant 0 : i32
    %c0_i32_0 = arith.constant 0 : i32
    %c0_i32_1 = arith.constant 0 : i32
    return %c0_i32, %c0_i32_0 : i32, i32
  }
  func.func @transform_3(%arg0: i32, %arg1: i32) -> (i32, i32) {
    %c0_i32 = arith.constant 0 : i32
    %c0_i32_0 = arith.constant 0 : i32
    %c0_i32_1 = arith.constant 0 : i32
    return %c0_i32, %c0_i32_0 : i32, i32
  }
  func.func @transform_4(%arg0: i32, %arg1: i32) -> (i32, i32) {
    %c0_i32 = arith.constant 0 : i32
    %c0_i32_0 = arith.constant 0 : i32
    %c0_i32_1 = arith.constant 0 : i32
    return %c0_i32, %c0_i32_0 : i32, i32
  }
  func.func @transform_5(%arg0: i32, %arg1: i32) -> (i32, i32) {
    %c0_i32 = arith.constant 0 : i32
    %c0_i32_0 = arith.constant 0 : i32
    return %c0_i32, %arg1 : i32, i32
  }
  func.func @transform_6(%arg0: i32, %arg1: i32) -> (i32, i32) {
    %c0_i32 = arith.constant 0 : i32
    %c0_i32_0 = arith.constant 0 : i32
    return %c0_i32, %arg1 : i32, i32
  }
  func.func @transform_7(%arg0: i32, %arg1: i32) -> (i32, i32) {
    %c0_i32 = arith.constant 0 : i32
    return %arg0, %arg1 : i32, i32
  }
}

module attributes {stable_mosaic.version = 11 : i64} {
  func.func @_fourier_pe_kernel(%arg0: i32, %arg1: i32, %arg2: memref<8x2xf32, #tpu.memory_space<vmem>>, %arg3: memref<2x32xf32, #tpu.memory_space<vmem>>, %arg4: memref<1x32xf32, #tpu.memory_space<vmem>>, %arg5: memref<32x128xf32, #tpu.memory_space<vmem>>, %arg6: memref<1x128xf32, #tpu.memory_space<vmem>>, %arg7: memref<128x128xf32, #tpu.memory_space<vmem>>, %arg8: memref<1x128xf32, #tpu.memory_space<vmem>>, %arg9: memref<8x128xf32, #tpu.memory_space<vmem>>, %arg10: memref<8x128xf32, #tpu.memory_space<vmem>>) attributes {dimension_semantics = [#tpu.dimension_semantics<parallel>, #tpu.dimension_semantics<arbitrary>], iteration_bounds = array<i64: 2, 1>, scalar_prefetch = 0 : i64, scratch_operands = 1 : i64, tpu.core_type = #tpu.core_type<tc>, window_params = [{transform_indices = @transform_0, window_bounds = array<i64: 8, 2>}, {pipeline_mode = #tpu.pipeline_mode<synchronous>, transform_indices = @transform_1, window_bounds = array<i64: 2, 32>}, {pipeline_mode = #tpu.pipeline_mode<synchronous>, transform_indices = @transform_2, window_bounds = array<i64: 1, 32>}, {pipeline_mode = #tpu.pipeline_mode<synchronous>, transform_indices = @transform_3, window_bounds = array<i64: 32, 128>}, {pipeline_mode = #tpu.pipeline_mode<synchronous>, transform_indices = @transform_4, window_bounds = array<i64: 1, 128>}, {transform_indices = @transform_5, window_bounds = array<i64: 128, 128>}, {transform_indices = @transform_6, window_bounds = array<i64: 1, 128>}, {transform_indices = @transform_7, window_bounds = array<i64: 8, 128>}]} {
    %c0_i32 = arith.constant 0 : i32
    %0 = arith.cmpi eq, %arg1, %c0_i32 : i32
    %1 = arith.extui %0 : i1 to i32
    %c0_i32_0 = arith.constant 0 : i32
    %2 = arith.cmpi ne, %1, %c0_i32_0 : i32
    scf.if %2 {
      %c0_8 = arith.constant 0 : index
      %c0_9 = arith.constant 0 : index
      %10 = vector.load %arg2[%c0_8, %c0_9] : memref<8x2xf32, #tpu.memory_space<vmem>>, vector<8x2xf32>
      %c0_10 = arith.constant 0 : index
      %c0_11 = arith.constant 0 : index
      %11 = vector.load %arg3[%c0_10, %c0_11] : memref<2x32xf32, #tpu.memory_space<vmem>>, vector<2x32xf32>
      %12 = vector.extract_strided_slice %10 {offsets = [0, 0], sizes = [8, 1], strides = [1, 1]} : vector<8x2xf32> to vector<8x1xf32>
      %13 = vector.extract_strided_slice %11 {offsets = [0, 0], sizes = [1, 32], strides = [1, 1]} : vector<2x32xf32> to vector<1x32xf32>
      %14 = vector.broadcast %12 : vector<8x1xf32> to vector<8x32xf32>
      %15 = vector.broadcast %13 : vector<1x32xf32> to vector<8x32xf32>
      %16 = arith.mulf %14, %15 : vector<8x32xf32>
      %17 = vector.extract_strided_slice %10 {offsets = [0, 1], sizes = [8, 1], strides = [1, 1]} : vector<8x2xf32> to vector<8x1xf32>
      %18 = vector.extract_strided_slice %11 {offsets = [1, 0], sizes = [1, 32], strides = [1, 1]} : vector<2x32xf32> to vector<1x32xf32>
      %19 = vector.broadcast %17 : vector<8x1xf32> to vector<8x32xf32>
      %20 = vector.broadcast %18 : vector<1x32xf32> to vector<8x32xf32>
      %21 = arith.mulf %19, %20 : vector<8x32xf32>
      %22 = arith.addf %16, %21 : vector<8x32xf32>
      %c0_12 = arith.constant 0 : index
      %c0_13 = arith.constant 0 : index
      %23 = vector.load %arg4[%c0_12, %c0_13] : memref<1x32xf32, #tpu.memory_space<vmem>>, vector<1x32xf32>
      %24 = vector.broadcast %23 : vector<1x32xf32> to vector<8x32xf32>
      %25 = arith.addf %22, %24 : vector<8x32xf32>
      %26 = math.sin %25 : vector<8x32xf32>
      %c0_14 = arith.constant 0 : index
      %c0_15 = arith.constant 0 : index
      %27 = vector.load %arg5[%c0_14, %c0_15] : memref<32x128xf32, #tpu.memory_space<vmem>>, vector<32x128xf32>
      %cst_16 = arith.constant dense<0.000000e+00> : vector<8x128xf32>
      %28 = tpu.matmul %26, %27, %cst_16 {dimension_numbers = #tpu.dot_dimension_numbers<[1], [0], [0], [1], [0, 0, 1, 1], [], []>} : vector<8x32xf32>, vector<32x128xf32>, vector<8x128xf32> -> vector<8x128xf32>
      %c0_17 = arith.constant 0 : index
      %c0_18 = arith.constant 0 : index
      %29 = vector.load %arg6[%c0_17, %c0_18] : memref<1x128xf32, #tpu.memory_space<vmem>>, vector<1x128xf32>
      %30 = vector.broadcast %29 : vector<1x128xf32> to vector<8x128xf32>
      %31 = arith.addf %28, %30 : vector<8x128xf32>
      %cst_19 = arith.constant 5.000000e-01 : f32
      %32 = vector.broadcast %cst_19 : f32 to vector<8x128xf32>
      %33 = arith.mulf %32, %31 : vector<8x128xf32>
      %cst_20 = arith.constant 0.707106769 : f32
      %34 = vector.broadcast %cst_20 : f32 to vector<8x128xf32>
      %35 = arith.mulf %31, %34 : vector<8x128xf32>
      %36 = math.erf %35 : vector<8x128xf32>
      %cst_21 = arith.constant 1.000000e+00 : f32
      %37 = vector.broadcast %cst_21 : f32 to vector<8x128xf32>
      %38 = arith.addf %37, %36 : vector<8x128xf32>
      %39 = arith.mulf %33, %38 : vector<8x128xf32>
      %c0_22 = arith.constant 0 : index
      %c0_23 = arith.constant 0 : index
      %40 = vector.load %arg10[%c0_22, %c0_23] : memref<8x128xf32, #tpu.memory_space<vmem>>, vector<8x128xf32>
      tpu.vector_store %arg10[%c0_22, %c0_23], %39 {strides = array<i32>} : memref<8x128xf32, #tpu.memory_space<vmem>>, vector<8x128xf32>,
    } else {
    }
    %c0 = arith.constant 0 : index
    %c0_1 = arith.constant 0 : index
    %3 = vector.load %arg10[%c0, %c0_1] : memref<8x128xf32, #tpu.memory_space<vmem>>, vector<8x128xf32>
    %c0_2 = arith.constant 0 : index
    %c0_3 = arith.constant 0 : index
    %4 = vector.load %arg7[%c0_2, %c0_3] : memref<128x128xf32, #tpu.memory_space<vmem>>, vector<128x128xf32>
    %cst = arith.constant dense<0.000000e+00> : vector<8x128xf32>
    %5 = tpu.matmul %3, %4, %cst {dimension_numbers = #tpu.dot_dimension_numbers<[1], [0], [0], [1], [0, 0, 1, 1], [], []>} : vector<8x128xf32>, vector<128x128xf32>, vector<8x128xf32> -> vector<8x128xf32>
    %c0_4 = arith.constant 0 : index
    %c0_5 = arith.constant 0 : index
    %6 = vector.load %arg8[%c0_4, %c0_5] : memref<1x128xf32, #tpu.memory_space<vmem>>, vector<1x128xf32>
    %7 = vector.broadcast %6 : vector<1x128xf32> to vector<8x128xf32>
    %8 = arith.addf %5, %7 : vector<8x128xf32>
    %c0_6 = arith.constant 0 : index
    %c0_7 = arith.constant 0 : index
    %9 = vector.load %arg9[%c0_6, %c0_7] : memref<8x128xf32, #tpu.memory_space<vmem>>, vector<8x128xf32>
    tpu.vector_store %arg9[%c0_6, %c0_7], %8 {strides = array<i32>} : memref<8x128xf32, #tpu.memory_space<vmem>>, vector<8x128xf32>,
    return
  }
  func.func @transform_0(%arg0: i32, %arg1: i32) -> (i32, i32) {
    %c0_i32 = arith.constant 0 : i32
    %c0_i32_0 = arith.constant 0 : i32
    return %arg0, %c0_i32 : i32, i32
  }
  func.func @transform_1(%arg0: i32, %arg1: i32) -> (i32, i32) {
    %c0_i32 = arith.constant 0 : i32
    %c0_i32_0 = arith.constant 0 : i32
    %c0_i32_1 = arith.constant 0 : i32
    return %c0_i32, %c0_i32_0 : i32, i32
  }
  func.func @transform_2(%arg0: i32, %arg1: i32) -> (i32, i32) {
    %c0_i32 = arith.constant 0 : i32
    %c0_i32_0 = arith.constant 0 : i32
    %c0_i32_1 = arith.constant 0 : i32
    return %c0_i32, %c0_i32_0 : i32, i32
  }
  func.func @transform_3(%arg0: i32, %arg1: i32) -> (i32, i32) {
    %c0_i32 = arith.constant 0 : i32
    %c0_i32_0 = arith.constant 0 : i32
    %c0_i32_1 = arith.constant 0 : i32
    return %c0_i32, %c0_i32_0 : i32, i32
  }
  func.func @transform_4(%arg0: i32, %arg1: i32) -> (i32, i32) {
    %c0_i32 = arith.constant 0 : i32
    %c0_i32_0 = arith.constant 0 : i32
    %c0_i32_1 = arith.constant 0 : i32
    return %c0_i32, %c0_i32_0 : i32, i32
  }
  func.func @transform_5(%arg0: i32, %arg1: i32) -> (i32, i32) {
    %c0_i32 = arith.constant 0 : i32
    %c0_i32_0 = arith.constant 0 : i32
    return %c0_i32, %arg1 : i32, i32
  }
  func.func @transform_6(%arg0: i32, %arg1: i32) -> (i32, i32) {
    %c0_i32 = arith.constant 0 : i32
    %c0_i32_0 = arith.constant 0 : i32
    return %c0_i32, %arg1 : i32, i32
  }
  func.func @transform_7(%arg0: i32, %arg1: i32) -> (i32, i32) {
    %c0_i32 = arith.constant 0 : i32
    return %arg0, %arg1 : i32, i32
  }
}

</mosaic_0001>

<llo_original>
// kernel: tpu_custom_call.1
$region0: #{tpu_custom_call.1}
  #allocation0 [shape = 'u32[]', space=smem, size = 0x4, offset = 0x4, fixed_abs, tag = 'smem constant byte address 0x4 - core index']
  #allocation1 [shape = 'u32[144,128]{1,0:T(1,128)}', space=vmem, size = 0x12000, scoped, tag = 'internal scratch']
  #allocation2 [shape = 'f32[8,128]{1,0:T(8,128)}', space=vmem, size = 0x1000, scoped, tag = 'scratch operand']
  %s0 = inlined_call_operand.vmem [shape: f32[16,2], index: 0, kind: input, shape index: {}]
  %s1 = inlined_call_operand.vmem [shape: f32[2,32], index: 1, kind: input, shape index: {}]
  %s2 = inlined_call_operand.vmem [shape: f32[1,32], index: 2, kind: input, shape index: {}]
  %s3 = inlined_call_operand.hbm [shape: f32[32,128], index: 3, kind: input, shape index: {}]
  %s4 = inlined_call_operand.vmem [shape: f32[1,128], index: 4, kind: input, shape index: {}]
  %s5 = inlined_call_operand.hbm [shape: f32[128,128], index: 5, kind: input, shape index: {}]
  %s6 = inlined_call_operand.vmem [shape: f32[1,128], index: 6, kind: input, shape index: {}]
  %s7 = inlined_call_operand.hbm [shape: f32[16,128], index: 7, kind: output, shape index: {}]
  %s8 = sld [smem:[#allocation0]]
  $region73: #{tpu_custom_call.1} parent=0
    _
  %s10 = ssub.s32 1, %s8
  %s11 = scalar_select 0, %s10, %s8
  $region1: #{tpu_custom_call.1} parent=0
    #allocation3 [shape = 'u8[16384]{0}', space=vmem, size = 0x4000, scoped, tag = 'input window, operand 3, single buffered']
    #allocation4 [shape = 's32[2]{0}', space=sflag, size = 0x8, scoped, tag = 'scoped memory for tpu_custom_call.1']
    #allocation5 [shape = 's32[2]{0}', space=sflag, size = 0x8, scoped, tag = 'scoped memory for tpu_custom_call.1']
    #allocation6 [shape = 'u8[65536]{0}', space=vmem, size = 0x10000, scoped, tag = 'input window, operand 5, single buffered']
    #allocation7 [shape = 's32[1]{0}', space=sflag, size = 0x4, scoped, tag = 'scoped memory for tpu_custom_call.1']
    #allocation8 [shape = 'u8[8192]{0}', space=vmem, size = 0x2000, scoped, tag = 'output window, operand 0']
    %12 = vsyncpa [#allocation4], 0
    %13 = vsyncpa [#allocation7], 0
    %14 = vsyncpa [#allocation5], 0
    %s15 = scalar_lea.sflag [#allocation5], 1
    %16 = vsyncpa %s15, 0
    loop: start=0, step=1, limit=4
    $region2: #{tpu_custom_call.1} parent=1 // loop_pre_header
      _
    $region3: #{tpu_custom_call.1} parent=1 // loop_header
      %s18 = sphi 0, %s22
      %p19 = scmp.ge.s32.totalorder %s18, 4
      %s25 = sphi 0, %s37
      %s26 = sphi 0, %s33
      %s27 = sphi 0, %s25
      %s28 = sphi 0, %s26
      %s29 = sphi 0, %s27
      %s30 = sphi 0, %s28
      %s40 = sphi 0, %s42
      %s43 = sphi 0, %s40
      %s44 = sphi 0, %s43
      %s60 = sphi 0, %s44
      %s64 = sphi 0, %s64
      %s66 = sphi 0, %s64
      %s67 = sphi 0, %s66
      %s81 = sphi 0, %s67
      %s85 = sphi 0, %s85
      %s87 = sphi 0, %s85
      %s88 = sphi 0, %s87
      %s102 = sphi 0, %s88
      %s106 = sphi 0, %s106
      %s108 = sphi 0, %s106
      %s109 = sphi 0, %s108
      %s123 = sphi 0, %s109
      %s127 = sphi 0, %s127
      %s129 = sphi 0, %s127
      %s130 = sphi 0, %s129
      %s144 = sphi 0, %s130
      %s150 = sphi 0, %s152
      %s153 = sphi 0, %s150
      %s154 = sphi 0, %s153
      %s170 = sphi 0, %s154
      %s176 = sphi 0, %s178
      %s179 = sphi 0, %s176
      %s180 = sphi 0, %s179
      %s196 = sphi 0, %s180
      %s204 = sphi 0, %s206
      %s207 = sphi 0, %s204
      %s208 = sphi 0, %s207
      %s224 = sphi 0, %s208
    $region4: #{tpu_custom_call.1} parent=1 // loop_header_branch
      %21 = sbr.rel (%p19) target = $region8
    $region5: #{tpu_custom_call.1} parent=1 // loop_body
      %s23 = ssub.s32 %s18, 1
      %s24 = ssub.s32 %s18, 2
      %s31 = sadd.s32 1, %s26
      %p32 = scmp.ge.s32.totalorder %s31, 1
      %s33 = scalar_select %p32, 0, %s31
      %s34 = sadd.s32 1, %s25
      %s35 = scalar_select %p32, %s34, %s25
      %p36 = scmp.ge.s32.totalorder %s35, 2
      %s37 = scalar_select %p36, 0, %s35
      %s38 = ssub.s32 %s25, %s37
      %p39 = scmp.eq.s32.totalorder %s38, 0
      %s41 = sadd.s32 %s40, 1
      %s42 = scalar_select %p39, %s40, %s41
      %p45 = pneg %p39
      %p46 = scmp.eq.s32.totalorder %s18, 1
      %p47 = por %p45, %p46
      %p48 = scmp.ne.s32.totalorder %s40, %s43
      %p49 = scmp.eq.s32.totalorder %s18, 0
      %p50 = por %p48, %p49
      %p51 = scmp.ne.s32.totalorder %s40, %s43
      %p52 = scmp.eq.s32.totalorder %s23, 1
      %p53 = por %p51, %p52
      %p54 = scmp.ne.s32.totalorder %s43, %s44
      %p55 = scmp.eq.s32.totalorder %s23, 0
      %p56 = por %p54, %p55
      %p57 = scmp.ne.s32.totalorder %s43, %s44
      %p58 = scmp.eq.s32.totalorder %s24, 1
      %p59 = por %p57, %p58
      %p61 = scmp.ne.s32.totalorder %s44, %s60
      %p62 = scmp.eq.s32.totalorder %s24, 0
      %p63 = por %p61, %p62
      %s65 = sadd.s32 %s64, 1
      %p68 = scmp.eq.s32.totalorder %s18, 1
      %p69 = scmp.ne.s32.totalorder %s64, %s66
      %p70 = scmp.eq.s32.totalorder %s18, 0
      %p71 = por %p69, %p70
      %p72 = scmp.ne.s32.totalorder %s64, %s66
      %p73 = scmp.eq.s32.totalorder %s23, 1
      %p74 = por %p72, %p73
      %p75 = scmp.ne.s32.totalorder %s66, %s67
      %p76 = scmp.eq.s32.totalorder %s23, 0
      %p77 = por %p75, %p76
      %p78 = scmp.ne.s32.totalorder %s66, %s67
      %p79 = scmp.eq.s32.totalorder %s24, 1
      %p80 = por %p78, %p79
      %p82 = scmp.ne.s32.totalorder %s67, %s81
      %p83 = scmp.eq.s32.totalorder %s24, 0
      %p84 = por %p82, %p83
      %s86 = sadd.s32 %s85, 1
      %p89 = scmp.eq.s32.totalorder %s18, 1
      %p90 = scmp.ne.s32.totalorder %s85, %s87
      %p91 = scmp.eq.s32.totalorder %s18, 0
      %p92 = por %p90, %p91
      %p93 = scmp.ne.s32.totalorder %s85, %s87
      %p94 = scmp.eq.s32.totalorder %s23, 1
      %p95 = por %p93, %p94
      %p96 = scmp.ne.s32.totalorder %s87, %s88
      %p97 = scmp.eq.s32.totalorder %s23, 0
      %p98 = por %p96, %p97
      %p99 = scmp.ne.s32.totalorder %s87, %s88
      %p100 = scmp.eq.s32.totalorder %s24, 1
      %p101 = por %p99, %p100
      %p103 = scmp.ne.s32.totalorder %s88, %s102
      %p104 = scmp.eq.s32.totalorder %s24, 0
      %p105 = por %p103, %p104
      %s107 = sadd.s32 %s106, 1
      %p110 = scmp.eq.s32.totalorder %s18, 1
      %p111 = scmp.ne.s32.totalorder %s106, %s108
      %p112 = scmp.eq.s32.totalorder %s18, 0
      %p113 = por %p111, %p112
      %p114 = scmp.ne.s32.totalorder %s106, %s108
      %p115 = scmp.eq.s32.totalorder %s23, 1
      %p116 = por %p114, %p115
      %p117 = scmp.ne.s32.totalorder %s108, %s109
      %p118 = scmp.eq.s32.totalorder %s23, 0
      %p119 = por %p117, %p118
      %p120 = scmp.ne.s32.totalorder %s108, %s109
      %p121 = scmp.eq.s32.totalorder %s24, 1
      %p122 = por %p120, %p121
      %p124 = scmp.ne.s32.totalorder %s109, %s123
      %p125 = scmp.eq.s32.totalorder %s24, 0
      %p126 = por %p124, %p125
      %s128 = sadd.s32 %s127, 1
      %p131 = scmp.eq.s32.totalorder %s18, 1
      %p132 = scmp.ne.s32.totalorder %s127, %s129
      %p133 = scmp.eq.s32.totalorder %s18, 0
      %p134 = por %p132, %p133
      %p135 = scmp.ne.s32.totalorder %s127, %s129
      %p136 = scmp.eq.s32.totalorder %s23, 1
      %p137 = por %p135, %p136
      %p138 = scmp.ne.s32.totalorder %s129, %s130
      %p139 = scmp.eq.s32.totalorder %s23, 0
      %p140 = por %p138, %p139
      %p141 = scmp.ne.s32.totalorder %s129, %s130
      %p142 = scmp.eq.s32.totalorder %s24, 1
      %p143 = por %p141, %p142
      %p145 = scmp.ne.s32.totalorder %s130, %s144
      %p146 = scmp.eq.s32.totalorder %s24, 0
      %p147 = por %p145, %p146
      %s148 = ssub.s32 %s26, %s33
      %p149 = scmp.eq.s32.totalorder %s148, 0
      %s151 = sadd.s32 %s150, 1
      %s152 = scalar_select %p149, %s150, %s151
      %p155 = pneg %p149
      %p156 = scmp.eq.s32.totalorder %s18, 1
      %p157 = por %p155, %p156
      %p158 = scmp.ne.s32.totalorder %s150, %s153
      %p159 = scmp.eq.s32.totalorder %s18, 0
      %p160 = por %p158, %p159
      %p161 = scmp.ne.s32.totalorder %s150, %s153
      %p162 = scmp.eq.s32.totalorder %s23, 1
      %p163 = por %p161, %p162
      %p164 = scmp.ne.s32.totalorder %s153, %s154
      %p165 = scmp.eq.s32.totalorder %s23, 0
      %p166 = por %p164, %p165
      %p167 = scmp.ne.s32.totalorder %s153, %s154
      %p168 = scmp.eq.s32.totalorder %s24, 1
      %p169 = por %p167, %p168
      %p171 = scmp.ne.s32.totalorder %s154, %s170
      %p172 = scmp.eq.s32.totalorder %s24, 0
      %p173 = por %p171, %p172
      %s174 = ssub.s32 %s26, %s33
      %p175 = scmp.eq.s32.totalorder %s174, 0
      %s177 = sadd.s32 %s176, 1
      %s178 = scalar_select %p175, %s176, %s177
      %p181 = pneg %p175
      %p182 = scmp.eq.s32.totalorder %s18, 1
      %p183 = por %p181, %p182
      %p184 = scmp.ne.s32.totalorder %s176, %s179
      %p185 = scmp.eq.s32.totalorder %s18, 0
      %p186 = por %p184, %p185
      %p187 = scmp.ne.s32.totalorder %s176, %s179
      %p188 = scmp.eq.s32.totalorder %s23, 1
      %p189 = por %p187, %p188
      %p190 = scmp.ne.s32.totalorder %s179, %s180
      %p191 = scmp.eq.s32.totalorder %s23, 0
      %p192 = por %p190, %p191
      %p193 = scmp.ne.s32.totalorder %s179, %s180
      %p194 = scmp.eq.s32.totalorder %s24, 1
      %p195 = por %p193, %p194
      %p197 = scmp.ne.s32.totalorder %s180, %s196
      %p198 = scmp.eq.s32.totalorder %s24, 0
      %p199 = por %p197, %p198
      %s200 = ssub.s32 %s25, %s37
      %s201 = ssub.s32 %s26, %s33
      %s202 = sor.u32 %s200, %s201
      %p203 = scmp.eq.s32.totalorder %s202, 0
      %s205 = sadd.s32 %s204, 1
      %s206 = scalar_select %p203, %s204, %s205
      %p209 = pneg %p203
      %p210 = scmp.eq.s32.totalorder %s18, 1
      %p211 = por %p209, %p210
      %p212 = scmp.ne.s32.totalorder %s204, %s207
      %p213 = scmp.eq.s32.totalorder %s18, 0
      %p214 = por %p212, %p213
      %p215 = scmp.ne.s32.totalorder %s204, %s207
      %p216 = scmp.eq.s32.totalorder %s23, 1
      %p217 = por %p215, %p216
      %p218 = scmp.ne.s32.totalorder %s207, %s208
      %p219 = scmp.eq.s32.totalorder %s23, 0
      %p220 = por %p218, %p219
      %p221 = scmp.ne.s32.totalorder %s207, %s208
      %p222 = scmp.eq.s32.totalorder %s24, 1
      %p223 = por %p221, %p222
      %p225 = scmp.ne.s32.totalorder %s208, %s224
      %p226 = scmp.eq.s32.totalorder %s24, 0
      %p227 = por %p225, %p226
      %p228 = scmp.le.s32.totalorder 1, %s18
      %p229 = scmp.lt.s32.totalorder %s18, 3
      %p230 = pnand %p228, %p229
      %p231 = pneg %p230
      // Predicated region
      $region9: #{tpu_custom_call.1} parent=5 // pred_check
        _
      $region10: #{tpu_custom_call.1} parent=5 // pred_check_branch
        %233 = sbr.rel (%p230) target = $region12
      $region11: #{tpu_custom_call.1} parent=5 // pred_region
        %s234 = ssub.s32 %s18, 1
        // Predicated region
        $region13: #{tpu_custom_call.1} parent=11 // pred_check
          %p235 = pneg %p77
        $region14: #{tpu_custom_call.1} parent=11 // pred_check_branch
          %237 = sbr.rel (%p235) target = $region16
        $region15: #{tpu_custom_call.1} parent=11 // pred_region
          _
        $region16: #{tpu_custom_call.1} parent=11 // pred_fallthru
          _
        // Predicated region
        $region17: #{tpu_custom_call.1} parent=11 // pred_check
          %p238 = pneg %p98
        $region18: #{tpu_custom_call.1} parent=11 // pred_check_branch
          %240 = sbr.rel (%p238) target = $region20
        $region19: #{tpu_custom_call.1} parent=11 // pred_region
          _
        $region20: #{tpu_custom_call.1} parent=11 // pred_fallthru
          _
        // Predicated region
        $region21: #{tpu_custom_call.1} parent=11 // pred_check
          %p241 = pneg %p119
        $region22: #{tpu_custom_call.1} parent=11 // pred_check_branch
          %243 = sbr.rel (%p241) target = $region24
        $region23: #{tpu_custom_call.1} parent=11 // pred_region
          %s245 = ssub.s32 512, 512
          %246 = vsyncadd [#allocation4], %s245
          %s247 = sshll.u32 [#allocation3], 4
          %s248 = int_to_ptr.vmem [resolvable:$true] %s247
          %253 = dma.hbm_to_vmem [thread:$0]  %s3, 512, %s248, [#allocation4], 128, 128, 8
        $region24: #{tpu_custom_call.1} parent=11 // pred_fallthru
          _
        // Predicated region
        $region25: #{tpu_custom_call.1} parent=11 // pred_check
          %p254 = pneg %p140
        $region26: #{tpu_custom_call.1} parent=11 // pred_check_branch
          %256 = sbr.rel (%p254) target = $region28
        $region27: #{tpu_custom_call.1} parent=11 // pred_region
          _
        $region28: #{tpu_custom_call.1} parent=11 // pred_fallthru
          _
        // Predicated region
        $region29: #{tpu_custom_call.1} parent=11 // pred_check
          %p257 = pneg %p166
        $region30: #{tpu_custom_call.1} parent=11 // pred_check_branch
          %259 = sbr.rel (%p257) target = $region32
        $region31: #{tpu_custom_call.1} parent=11 // pred_region
          %s261 = ssub.s32 2048, 2048
          %262 = vsyncadd [#allocation7], %s261
          %s263 = smul.addr %s28, 128
          %s264 = scalar_lea.hbm %s5, %s263
          %s265 = sshll.u32 [#allocation6], 4
          %s266 = int_to_ptr.vmem [resolvable:$true] %s265
          %271 = dma.hbm_to_vmem [thread:$0]  %s264, 2048, %s266, [#allocation7], 128, 128, 8
        $region32: #{tpu_custom_call.1} parent=11 // pred_fallthru
          _
        // Predicated region
        $region33: #{tpu_custom_call.1} parent=11 // pred_check
          %p272 = pneg %p192
        $region34: #{tpu_custom_call.1} parent=11 // pred_check_branch
          %274 = sbr.rel (%p272) target = $region36
        $region35: #{tpu_custom_call.1} parent=11 // pred_region
          %p275 = scmp.lt.s32.totalorder %s28, 0
          %s276 = scalar_select %p275, %s28, 0
          %s277 = scalar_lea.vmem %s6, %s276
        $region36: #{tpu_custom_call.1} parent=11 // pred_fallthru
          _
      $region12: #{tpu_custom_call.1} parent=5 // pred_fallthru
        _
      %p278 = scmp.lt.s32.totalorder %s18, 2
      // Predicated region
      $region37: #{tpu_custom_call.1} parent=5 // pred_check
        %p279 = pneg %p278
      $region38: #{tpu_custom_call.1} parent=5 // pred_check_branch
        %281 = sbr.rel (%p279) target = $region40
      $region39: #{tpu_custom_call.1} parent=5 // pred_region
        // Predicated region
        $region41: #{tpu_custom_call.1} parent=39 // pred_check
          %p282 = pneg %p50
        $region42: #{tpu_custom_call.1} parent=39 // pred_check_branch
          %284 = sbr.rel (%p282) target = $region44
        $region43: #{tpu_custom_call.1} parent=39 // pred_region
          %p285 = scmp.lt.s32.totalorder %s25, 1
          %s286 = scalar_select %p285, %s25, 1
          %s287 = smul.addr %s286, 8
          %s288 = scalar_lea.vmem %s0, %s287
        $region44: #{tpu_custom_call.1} parent=39 // pred_fallthru
          _
      $region40: #{tpu_custom_call.1} parent=5 // pred_fallthru
        _
      %p289 = scmp.le.s32.totalorder 1, %s18
      %p290 = scmp.lt.s32.totalorder %s18, 3
      %p291 = pnand %p289, %p290
      %p292 = pneg %p291
      // Predicated region
      $region45: #{tpu_custom_call.1} parent=5 // pred_check
        _
      $region46: #{tpu_custom_call.1} parent=5 // pred_check_branch
        %294 = sbr.rel (%p291) target = $region48
      $region47: #{tpu_custom_call.1} parent=5 // pred_region
        %s295 = ssub.s32 %s18, 1
        // Predicated region
        $region49: #{tpu_custom_call.1} parent=47 // pred_check
          %p296 = pneg %p119
        $region50: #{tpu_custom_call.1} parent=47 // pred_check_branch
          %298 = sbr.rel (%p296) target = $region52
        $region51: #{tpu_custom_call.1} parent=47 // pred_region
          %299 = dma.done [#allocation4], 512
        $region52: #{tpu_custom_call.1} parent=47 // pred_fallthru
          _
        // Predicated region
        $region53: #{tpu_custom_call.1} parent=47 // pred_check
          %p300 = pneg %p166
        $region54: #{tpu_custom_call.1} parent=47 // pred_check_branch
          %302 = sbr.rel (%p300) target = $region56
        $region55: #{tpu_custom_call.1} parent=47 // pred_region
          %303 = dma.done [#allocation7], 2048
        $region56: #{tpu_custom_call.1} parent=47 // pred_fallthru
          _
        %p304 = scmp.lt.s32.totalorder %s27, 1
        %s305 = scalar_select %p304, %s27, 1
        %s306 = smul.addr %s305, 8
        %s307 = scalar_lea.vmem %s0, %s306
        %p308 = pneg %p56
        %p309 = pneg %p53
        %p310 = pneg %p77
        %p311 = pneg %p74
        %p312 = pneg %p98
        %p313 = pneg %p95
        %p314 = pneg %p119
        %p315 = pneg %p116
        %p316 = pneg %p140
        %p317 = pneg %p137
        %p318 = pneg %p166
        %p319 = pneg %p163
        %p320 = scmp.lt.s32.totalorder %s28, 0
        %s321 = scalar_select %p320, %s28, 0
        %s322 = scalar_lea.vmem %s6, %s321
        %p323 = pneg %p192
        %p324 = pneg %p189
        %p325 = pneg %p220
        %p326 = pneg %p217
        %s327 = sand.u32 %s207, 1
        %s328 = scalar_lea.sflag [#allocation5], %s327
        %s329 = sand.u32 %s207, 1
        %s330 = smul.addr %s329, 8
        %s331 = scalar_lea.vmem [#allocation8], %s330
        %p332 = scmp.lt.s32.totalorder %s27, 1
        %s333 = scalar_select %p332, %s27, 1
        %s334 = smul.addr %s333, 8
        %s335 = scalar_lea.vmem %s0, %s334
        %p336 = scmp.lt.s32.totalorder %s28, 0
        %s337 = scalar_select %p336, %s28, 0
        %s338 = scalar_lea.vmem %s6, %s337
        %p339 = scmp.eq.s32.totalorder %s28, 0
        // Predicated region
        $region57: #{tpu_custom_call.1} parent=47 // pred_check
          %p340 = pneg %p339
        $region58: #{tpu_custom_call.1} parent=47 // pred_check_branch
          %342 = sbr.rel (%p340) target = $region60
        $region59: #{tpu_custom_call.1} parent=47 // pred_region
          %v343 = vld [vmem:[%s335] sm:$0xff]
          %v344 = vld [vmem:[%s1] sm:$0x3]
          %346 = vset.pattern.permute.xlu0 0
          %347 = vperm.xlu0 %346, %v343
          %v348 = vpop.permute.xlu0 %347
          %v350 = vlaneseq
          %v351 = vshrl.u32 %v350, 7
          %v352 = vsub.s32 0, %v351
          %v353 = vrot.slane %v344, %v352
          %v354 = vmul.f32 %v348, %v353
          %355 = vset.pattern.permute.xlu0 1
          %356 = vperm.xlu0 %355, %v343
          %v357 = vpop.permute.xlu0 %356
          %v359 = vlaneseq
          %v360 = vshrl.u32 %v359, 7
          %v361 = vsub.s32 1, %v360
          %v362 = vrot.slane %v344, %v361
          %v363 = vmul.f32 %v357, %v362
          %v364 = vadd.f32 %v354, %v363
          %v365 = vld [vmem:[%s2] sm:$0x1]
          %v367 = vlaneseq
          %v368 = vshrl.u32 %v367, 7
          %v369 = vsub.s32 0, %v368
          %v370 = vrot.slane %v365, %v369
          %v372 = vadd.f32 %v364, %v370
          %v373 = vand.u32 2147483647, %v372
          %vm374 = vcmp.le.f32.partialorder %v373, 0.7853982
          %vm375 = vcmp.lt.s32.totalorder %v372, 0
          %v376 = vand.u32 %v372, 2139095040
          %v377 = vshrl.u32 %v376, 23
          %v378 = vsub.s32 %v377, 127
          %v379 = vand.u32 2147483647, %v372
          %v380 = vand.u32 %v379, 8388607
          %v381 = vor.u32 %v380, 8388608
          %v382 = vsub.s32 0, %v381
          %v383 = vadd.s32 %v378, 1
          %vm384 = vcmp.gt.s32.totalorder %v383, 0
          %v385 = vsel %vm384, %v383, 0
          %v386 = vshrl.u32 %v385, 5
          %v387 = vand.u32 %v385, 31
          %v388 = vsub.s32 32, %v387
          %v389 = vshrl.u32 683565275, %v388
          %v390 = vshll.u32 683565275, %v387
          %v391 = vshrl.u32 2475754826, %v388
          %v392 = vor.u32 %v390, %v391
          %v393 = vshll.u32 2475754826, %v387
          %v394 = vshrl.u32 2131351028, %v388
          %v395 = vor.u32 %v393, %v394
          %v396 = vshll.u32 2131351028, %v387
          %v397 = vshrl.u32 2102212464, %v388
          %v398 = vor.u32 %v396, %v397
          %v399 = vshll.u32 2102212464, %v387
          %v400 = vshrl.u32 920167782, %v388
          %v401 = vor.u32 %v399, %v400
          %v402 = vshll.u32 920167782, %v387
          %v403 = vshrl.u32 1326507024, %v388
          %v404 = vor.u32 %v402, %v403
          %vm405 = vcmp.lt.s32.totalorder %v386, 1
          %vm406 = vcmp.lt.s32.totalorder %v386, 2
          %vm407 = vcmp.lt.s32.totalorder %v386, 3
          %vm408 = vcmp.lt.s32.totalorder %v386, 4
          %v409 = vsel %vm405, %v389, %v392
          %v410 = vsel %vm408, %v398, 2102212464
          %v411 = vsel %vm407, %v395, %v410
          %v412 = vsel %vm406, %v409, %v411
          %v413 = vsel %vm405, %v392, %v395
          %v414 = vsel %vm408, %v401, 920167782
          %v415 = vsel %vm407, %v398, %v414
          %v416 = vsel %vm406, %v413, %v415
          %v417 = vsel %vm405, %v395, %v398
          %v418 = vsel %vm408, %v404, 1326507024
          %v419 = vsel %vm407, %v401, %v418
          %v420 = vsel %vm406, %v417, %v419
          %v421 = vshll.u32 %v381, 8
          %v422 = vmul.u32.u64.compose %v421, %v420
          %v423 = vextract.low.u32 %v422
          %v424 = vextract.high.u32 %v422
          %v425 = vmul.u32.u64.compose %v421, %v416
          %v426 = vextract.low.u32 %v425
          %v427 = vextract.high.u32 %v425
          %v428 = vmul.u32 %v421, %v412
          %v429 = vadd.s32 %v424, %v426
          %vm430 = vc.u32 %v424, %v426
          %v431 = vadd.s32 %v427, 1
          %v432 = vsel %vm430, %v431, %v427
          %v433 = vadd.s32 %v428, %v432
          %v434 = vadd.s32 %v433, 536870912
          %v435 = vshrl.u32 %v434, 30
          %v436 = vshll.u32 %v435, 30
          %v437 = vsub.s32 %v433, %v436
          %vm438 = vcmp.lt.s32.totalorder %v437, 0
          %v439 = vsub.s32 0, %v437
          %v440 = vsel %vm438, %v439, %v437
          %v441 = vclz %v440
          %v442 = vsub.s32 %v441, 2
          %vm443 = vcmp.gt.s32.totalorder 0, %v442
          %v444 = vsel %vm443, 0, %v442
          %v445 = vsub.s32 32, %v444
          %v446 = vshll.u32 %v437, %v444
          %v447 = vshrl.u32 %v429, %v445
          %v448 = vor.u32 %v446, %v447
          %v449 = vsub.s32 4294967266, %v444
          %v450 = vadd.s32 %v449, 127
          %v451 = vshll.u32 %v450, 23
          %v452 = vor.u32 4788187, %v451
          %v453 = vand.u32 2147483647, %v452
          %v455 = vcvt.s32.f32 %v448
          %v456 = vmul.f32 %v455, %v453
          %v457 = vxor.u32 %v456, 2147483648
          %v458 = vsel %vm375, %v457, %v456
          %v459 = vsub.s32 4, %v435
          %v460 = vsel %vm375, %v459, %v435
          %v461 = vsel %vm374, %v372, %v458
          %v462 = vsel %vm374, 0, %v460
          %v463 = vcosq.f32.pop %v461
          %v464 = vsinq.f32.pop %v461
          %vm465 = vweird.f32 %v372
          %v466 = vadd.s32 %v462, 3
          %v467 = vand.u32 %v466, 3
          %vm468 = vcmp.lt.s32.totalorder %v467, 2
          %vm469 = vcmp.eq.s32.totalorder %v467, 0
          %v470 = vxor.u32 %v464, 2147483648
          %v471 = vsel %vm469, %v463, %v470
          %vm472 = vcmp.eq.s32.totalorder %v467, 2
          %v473 = vxor.u32 %v463, 2147483648
          %v474 = vsel %vm472, %v473, %v464
          %v475 = vsel %vm468, %v471, %v474
          %v476 = vsel %vm465, nan, %v475
          %v477 = vld [vmem:[#allocation3] sm:$0xff]
          %v478 = vld [vmem:[#allocation3 + $0x8] sm:$0xff]
          %v479 = vld [vmem:[#allocation3 + $0x10] sm:$0xff]
          %v480 = vld [vmem:[#allocation3 + $0x18] sm:$0xff]
          %v481 = vld [vmem:[%s4] sm:$0x1]
          %v483 = vlaneseq
          %v484 = vshrl.u32 %v483, 7
          %v485 = vsub.s32 0, %v484
          %v486 = vrot.slane %v481, %v485
          %vm488 = vcmask 261120
          %v490 = vsel %vm488, %v476, 0
          %492 = vmatprep.subr.mxu0 0.0
          %493 = vmatpush1.msra.mxu0 %v477
          %494 = vmatprep.subr.mxu0 0.0
          %495 = vmatpush1.msra.mxu0 %v478
          %496 = vmatprep.subr.mxu0 0.0
          %497 = vmatpush1.msra.mxu0 %v479
          %498 = vmatprep.subr.mxu0 0.0
          %499 = vmatpush1.msra.mxu0 %v480
          %500 = vmatprep.subr.mxu0 0.0
          %501 = vmatpush1.msra.mxu0 0.0
          %502 = vmatprep.subr.mxu0 0.0
          %503 = vmatpush1.msra.mxu0 0.0
          %504 = vmatprep.subr.mxu0 0.0
          %505 = vmatpush1.msra.mxu0 0.0
          %506 = vmatprep.subr.mxu0 0.0
          %507 = vmatpush1.msra.mxu0 0.0
          %508 = vmatprep.subr.mxu0 0.0
          %509 = vmatpush1.msra.mxu0 0.0
          %510 = vmatprep.subr.mxu0 0.0
          %511 = vmatpush1.msra.mxu0 0.0
          %512 = vmatprep.subr.mxu0 0.0
          %513 = vmatpush1.msra.mxu0 0.0
          %514 = vmatprep.subr.mxu0 0.0
          %515 = vmatpush1.msra.mxu0 0.0
          %516 = vmatprep.subr.mxu0 0.0
          %517 = vmatpush1.msra.mxu0 0.0
          %518 = vmatprep.subr.mxu0 0.0
          %519 = vmatpush1.msra.mxu0 0.0
          %520 = vmatprep.subr.mxu0 0.0
          %521 = vmatpush1.msra.mxu0 0.0
          %522 = vmatprep.subr.mxu0 0.0
          %523 = vmatpush1.msra.mxu0 0.0
          %524 = vmatprep.subr.mxu0 0.0
          %525 = vmatpush1.msra.mxu0 0.0
          %526 = vmatprep.subr.mxu0 0.0
          %527 = vmatpush1.msra.mxu0 0.0
          %528 = vmatprep.subr.mxu0 0.0
          %529 = vmatpush1.msra.mxu0 0.0
          %530 = vmatprep.subr.mxu0 0.0
          %531 = vmatpush1.msra.mxu0 0.0
          %532 = vmatprep.subr.mxu0 0.0
          %533 = vmatpush1.msra.mxu0 0.0
          %534 = vmatprep.subr.mxu0 0.0
          %535 = vmatpush1.msra.mxu0 0.0
          %536 = vmatprep.subr.mxu0 0.0
          %537 = vmatpush1.msra.mxu0 0.0
          %538 = vmatprep.subr.mxu0 0.0
          %539 = vmatpush1.msra.mxu0 0.0
          %540 = vmatprep.subr.mxu0 0.0
          %541 = vmatpush1.msra.mxu0 0.0
          %542 = vmatprep.subr.mxu0 0.0
          %543 = vmatpush1.msra.mxu0 0.0
          %544 = vmatprep.subr.mxu0 0.0
          %545 = vmatpush1.msra.mxu0 0.0
          %546 = vmatprep.subr.mxu0 0.0
          %547 = vmatpush1.msra.mxu0 0.0
          %548 = vmatprep.subr.mxu0 0.0
          %549 = vmatpush1.msra.mxu0 0.0
          %550 = vmatprep.subr.mxu0 0.0
          %551 = vmatpush1.msra.mxu0 0.0
          %552 = vmatprep.subr.mxu0 0.0
          %553 = vmatpush1.msra.mxu0 0.0
          %554 = vmatprep.subr.mxu0 0.0
          %555 = vmatpush1.msra.mxu0 0.0
          %556 = vmatprep.mubr.f32.mxu0 0.0
          %557 = vmatmul.mubr.f32.gmra.mrb[0].mxu0 %v490
          %v558 = vpop.f32.mrb[0].mxu0
          %v559 = vadd.f32 %v486, %v558
          %v560 = vpop.f32.mrb[0].mxu0
          %561 = vdwg.mxu0
          %v562 = vmul.f32 %v559, 0.5
          %v563 = vmul.f32 %v559, 0.70710677
          %v564 = verf.f32.pop %v563
          %v565 = vadd.f32 %v564, 1.0
          %v566 = vmul.f32 %v562, %v565
          %567 = vst [vmem:[#allocation2] sm:$0xff] %v566
        $region60: #{tpu_custom_call.1} parent=47 // pred_fallthru
          _
        %v568 = vld [vmem:[#allocation2] sm:$0xff]
        %v569 = vld [vmem:[#allocation6] sm:$0xff]
        %v570 = vld [vmem:[#allocation6 + $0x8] sm:$0xff]
        %v571 = vld [vmem:[#allocation6 + $0x10] sm:$0xff]
        %v572 = vld [vmem:[#allocation6 + $0x18] sm:$0xff]
        %v573 = vld [vmem:[#allocation6 + $0x20] sm:$0xff]
        %v574 = vld [vmem:[#allocation6 + $0x28] sm:$0xff]
        %v575 = vld [vmem:[#allocation6 + $0x30] sm:$0xff]
        %v576 = vld [vmem:[#allocation6 + $0x38] sm:$0xff]
        %v577 = vld [vmem:[#allocation6 + $0x40] sm:$0xff]
        %v578 = vld [vmem:[#allocation6 + $0x48] sm:$0xff]
        %v579 = vld [vmem:[#allocation6 + $0x50] sm:$0xff]
        %v580 = vld [vmem:[#allocation6 + $0x58] sm:$0xff]
        %v581 = vld [vmem:[#allocation6 + $0x60] sm:$0xff]
        %v582 = vld [vmem:[#allocation6 + $0x68] sm:$0xff]
        %v583 = vld [vmem:[#allocation6 + $0x70] sm:$0xff]
        %v584 = vld [vmem:[#allocation6 + $0x78] sm:$0xff]
        %v585 = vld [vmem:[%s338] sm:$0x1]
        %v587 = vlaneseq
        %v588 = vshrl.u32 %v587, 7
        %v589 = vsub.s32 0, %v588
        %v590 = vrot.slane %v585, %v589
        %592 = vmatprep.subr.mxu0 0.0
        %593 = vmatpush1.msra.mxu0 %v569
        %594 = vmatprep.subr.mxu0 0.0
        %595 = vmatpush1.msra.mxu0 %v570
        %596 = vmatprep.subr.mxu0 0.0
        %597 = vmatpush1.msra.mxu0 %v571
        %598 = vmatprep.subr.mxu0 0.0
        %599 = vmatpush1.msra.mxu0 %v572
        %600 = vmatprep.subr.mxu0 0.0
        %601 = vmatpush1.msra.mxu0 %v573
        %602 = vmatprep.subr.mxu0 0.0
        %603 = vmatpush1.msra.mxu0 %v574
        %604 = vmatprep.subr.mxu0 0.0
        %605 = vmatpush1.msra.mxu0 %v575
        %606 = vmatprep.subr.mxu0 0.0
        %607 = vmatpush1.msra.mxu0 %v576
        %608 = vmatprep.subr.mxu0 0.0
        %609 = vmatpush1.msra.mxu0 %v577
        %610 = vmatprep.subr.mxu0 0.0
        %611 = vmatpush1.msra.mxu0 %v578
        %612 = vmatprep.subr.mxu0 0.0
        %613 = vmatpush1.msra.mxu0 %v579
        %614 = vmatprep.subr.mxu0 0.0
        %615 = vmatpush1.msra.mxu0 %v580
        %616 = vmatprep.subr.mxu0 0.0
        %617 = vmatpush1.msra.mxu0 %v581
        %618 = vmatprep.subr.mxu0 0.0
        %619 = vmatpush1.msra.mxu0 %v582
        %620 = vmatprep.subr.mxu0 0.0
        %621 = vmatpush1.msra.mxu0 %v583
        %622 = vmatprep.subr.mxu0 0.0
        %623 = vmatpush1.msra.mxu0 %v584
        %624 = vmatprep.subr.mxu0 0.0
        %625 = vmatpush1.msra.mxu0 0.0
        %626 = vmatprep.subr.mxu0 0.0
        %627 = vmatpush1.msra.mxu0 0.0
        %628 = vmatprep.subr.mxu0 0.0
        %629 = vmatpush1.msra.mxu0 0.0
        %630 = vmatprep.subr.mxu0 0.0
        %631 = vmatpush1.msra.mxu0 0.0
        %632 = vmatprep.subr.mxu0 0.0
        %633 = vmatpush1.msra.mxu0 0.0
        %634 = vmatprep.subr.mxu0 0.0
        %635 = vmatpush1.msra.mxu0 0.0
        %636 = vmatprep.subr.mxu0 0.0
        %637 = vmatpush1.msra.mxu0 0.0
        %638 = vmatprep.subr.mxu0 0.0
        %639 = vmatpush1.msra.mxu0 0.0
        %640 = vmatprep.subr.mxu0 0.0
        %641 = vmatpush1.msra.mxu0 0.0
        %642 = vmatprep.subr.mxu0 0.0
        %643 = vmatpush1.msra.mxu0 0.0
        %644 = vmatprep.subr.mxu0 0.0
        %645 = vmatpush1.msra.mxu0 0.0
        %646 = vmatprep.subr.mxu0 0.0
        %647 = vmatpush1.msra.mxu0 0.0
        %648 = vmatprep.subr.mxu0 0.0
        %649 = vmatpush1.msra.mxu0 0.0
        %650 = vmatprep.subr.mxu0 0.0
        %651 = vmatpush1.msra.mxu0 0.0
        %652 = vmatprep.subr.mxu0 0.0
        %653 = vmatpush1.msra.mxu0 0.0
        %654 = vmatprep.subr.mxu0 0.0
        %655 = vmatpush1.msra.mxu0 0.0
        %656 = vmatprep.mubr.f32.mxu0 0.0
        %657 = vmatmul.mubr.f32.gmra.mrb[0].mxu0 %v568
        %v658 = vpop.f32.mrb[0].mxu0
        %v659 = vadd.f32 %v590, %v658
        %v660 = vpop.f32.mrb[0].mxu0
        %661 = vdwg.mxu0
        %662 = vst [vmem:[%s331] sm:$0xff] %v659
        %s663 = sand.u32 %s207, 1
        %s664 = scalar_lea.sflag [#allocation5], %s663
        %s665 = sand.u32 %s207, 1
        %s666 = smul.addr %s665, 8
        %s667 = scalar_lea.vmem [#allocation8], %s666
        // Predicated region
        $region61: #{tpu_custom_call.1} parent=47 // pred_check
          %p668 = pneg %p217
        $region62: #{tpu_custom_call.1} parent=47 // pred_check_branch
          %670 = sbr.rel (%p668) target = $region64
        $region63: #{tpu_custom_call.1} parent=47 // pred_region
          %s672 = ssub.s32 128, 128
          %673 = vsyncadd %s664, %s672
          %s674 = sadd.s32 %s28, %s27
          %s675 = smul.addr %s674, 128
          %s676 = scalar_lea.hbm %s7, %s675
          %s678 = sshll.u32 %s667, 4
          %s679 = int_to_ptr.vmem [resolvable:$true] %s678
          %681 = dma.vmem_to_hbm [thread:$0]  %s679, 128, %s676, %s664
        $region64: #{tpu_custom_call.1} parent=47 // pred_fallthru
          _
      $region48: #{tpu_custom_call.1} parent=5 // pred_fallthru
        _
      %p682 = scmp.le.s32.totalorder 2, %s18
      // Predicated region
      $region65: #{tpu_custom_call.1} parent=5 // pred_check
        %p683 = pneg %p682
      $region66: #{tpu_custom_call.1} parent=5 // pred_check_branch
        %685 = sbr.rel (%p683) target = $region68
      $region67: #{tpu_custom_call.1} parent=5 // pred_region
        %s686 = ssub.s32 %s18, 2
        // Predicated region
        $region69: #{tpu_custom_call.1} parent=67 // pred_check
          %p687 = pneg %p223
        $region70: #{tpu_custom_call.1} parent=67 // pred_check_branch
          %689 = sbr.rel (%p687) target = $region72
        $region71: #{tpu_custom_call.1} parent=67 // pred_region
          %s690 = sand.u32 %s208, 1
          %s691 = scalar_lea.sflag [#allocation5], %s690
          %s692 = sand.u32 %s208, 1
          %s693 = smul.addr %s692, 8
          %s694 = scalar_lea.vmem [#allocation8], %s693
          %695 = dma.done %s691, 128
        $region72: #{tpu_custom_call.1} parent=67 // pred_fallthru
          _
      $region68: #{tpu_custom_call.1} parent=5 // pred_fallthru
        _
    $region6: #{tpu_custom_call.1} parent=1 // loop_footer
      %s22 = sadd.s32 1, %s18
    $region7: #{tpu_custom_call.1} parent=1 // loop_footer_branch
      %17 = sbr.rel target = $region3
    $region8: #{tpu_custom_call.1} parent=1 // loop_exit
      _
    %696 = vsyncpa [#allocation4], 1
    %s697 = scalar_lea.sflag [#allocation4], 1
    %698 = vsyncpa %s697, 1
    %699 = vsyncpa [#allocation7], 1
    %700 = vsyncpa [#allocation5], 1
    %s701 = scalar_lea.sflag [#allocation5], 1
    %702 = vsyncpa %s701, 1

// kernel: tpu_custom_call.1
$region0: #{tpu_custom_call.1}
  #allocation0 [shape = 'u32[]', space=smem, size = 0x4, offset = 0x4, fixed_abs, tag = 'smem constant byte address 0x4 - core index']
  #allocation1 [shape = 'u32[144,128]{1,0:T(1,128)}', space=vmem, size = 0x12000, scoped, tag = 'internal scratch']
  #allocation2 [shape = 'f32[8,128]{1,0:T(8,128)}', space=vmem, size = 0x1000, scoped, tag = 'scratch operand']
  %s0 = inlined_call_operand.vmem [shape: f32[16,2], index: 0, kind: input, shape index: {}]
  %s1 = inlined_call_operand.vmem [shape: f32[2,32], index: 1, kind: input, shape index: {}]
  %s2 = inlined_call_operand.vmem [shape: f32[1,32], index: 2, kind: input, shape index: {}]
  %s3 = inlined_call_operand.hbm [shape: f32[32,128], index: 3, kind: input, shape index: {}]
  %s4 = inlined_call_operand.vmem [shape: f32[1,128], index: 4, kind: input, shape index: {}]
  %s5 = inlined_call_operand.hbm [shape: f32[128,128], index: 5, kind: input, shape index: {}]
  %s6 = inlined_call_operand.vmem [shape: f32[1,128], index: 6, kind: input, shape index: {}]
  %s7 = inlined_call_operand.hbm [shape: f32[16,128], index: 7, kind: output, shape index: {}]
  %s8 = sld [smem:[#allocation0]]
  $region73: #{tpu_custom_call.1} parent=0
    _
  %s10 = ssub.s32 1, %s8
  %s11 = scalar_select 0, %s10, %s8
  $region1: #{tpu_custom_call.1} parent=0
    #allocation3 [shape = 'u8[16384]{0}', space=vmem, size = 0x4000, scoped, tag = 'input window, operand 3, single buffered']
    #allocation4 [shape = 's32[2]{0}', space=sflag, size = 0x8, scoped, tag = 'scoped memory for tpu_custom_call.1']
    #allocation5 [shape = 's32[2]{0}', space=sflag, size = 0x8, scoped, tag = 'scoped memory for tpu_custom_call.1']
    #allocation6 [shape = 'u8[65536]{0}', space=vmem, size = 0x10000, scoped, tag = 'input window, operand 5, single buffered']
    #allocation7 [shape = 's32[1]{0}', space=sflag, size = 0x4, scoped, tag = 'scoped memory for tpu_custom_call.1']
    #allocation8 [shape = 'u8[8192]{0}', space=vmem, size = 0x2000, scoped, tag = 'output window, operand 0']
    %12 = vsyncpa [#allocation4], 0
    %13 = vsyncpa [#allocation7], 0
    %14 = vsyncpa [#allocation5], 0
    %s15 = scalar_lea.sflag [#allocation5], 1
    %16 = vsyncpa %s15, 0
    loop: start=0, step=1, limit=4
    $region2: #{tpu_custom_call.1} parent=1 // loop_pre_header
      _
    $region3: #{tpu_custom_call.1} parent=1 // loop_header
      %s18 = sphi 0, %s22
      %p19 = scmp.ge.s32.totalorder %s18, 4
      %s25 = sphi 0, %s37
      %s26 = sphi 0, %s33
      %s27 = sphi 0, %s25
      %s28 = sphi 0, %s26
      %s29 = sphi 0, %s27
      %s30 = sphi 0, %s28
      %s40 = sphi 0, %s42
      %s43 = sphi 0, %s40
      %s44 = sphi 0, %s43
      %s60 = sphi 0, %s44
      %s64 = sphi 0, %s64
      %s66 = sphi 0, %s64
      %s67 = sphi 0, %s66
      %s81 = sphi 0, %s67
      %s85 = sphi 0, %s85
      %s87 = sphi 0, %s85
      %s88 = sphi 0, %s87
      %s102 = sphi 0, %s88
      %s106 = sphi 0, %s106
      %s108 = sphi 0, %s106
      %s109 = sphi 0, %s108
      %s123 = sphi 0, %s109
      %s127 = sphi 0, %s127
      %s129 = sphi 0, %s127
      %s130 = sphi 0, %s129
      %s144 = sphi 0, %s130
      %s150 = sphi 0, %s152
      %s153 = sphi 0, %s150
      %s154 = sphi 0, %s153
      %s170 = sphi 0, %s154
      %s176 = sphi 0, %s178
      %s179 = sphi 0, %s176
      %s180 = sphi 0, %s179
      %s196 = sphi 0, %s180
      %s204 = sphi 0, %s206
      %s207 = sphi 0, %s204
      %s208 = sphi 0, %s207
      %s224 = sphi 0, %s208
    $region4: #{tpu_custom_call.1} parent=1 // loop_header_branch
      %21 = sbr.rel (%p19) target = $region8
    $region5: #{tpu_custom_call.1} parent=1 // loop_body
      %s23 = ssub.s32 %s18, 1
      %s24 = ssub.s32 %s18, 2
      %s31 = sadd.s32 1, %s26
      %p32 = scmp.ge.s32.totalorder %s31, 1
      %s33 = scalar_select %p32, 0, %s31
      %s34 = sadd.s32 1, %s25
      %s35 = scalar_select %p32, %s34, %s25
      %p36 = scmp.ge.s32.totalorder %s35, 2
      %s37 = scalar_select %p36, 0, %s35
      %s38 = ssub.s32 %s25, %s37
      %p39 = scmp.eq.s32.totalorder %s38, 0
      %s41 = sadd.s32 %s40, 1
      %s42 = scalar_select %p39, %s40, %s41
      %p45 = pneg %p39
      %p46 = scmp.eq.s32.totalorder %s18, 1
      %p47 = por %p45, %p46
      %p48 = scmp.ne.s32.totalorder %s40, %s43
      %p49 = scmp.eq.s32.totalorder %s18, 0
      %p50 = por %p48, %p49
      %p51 = scmp.ne.s32.totalorder %s40, %s43
      %p52 = scmp.eq.s32.totalorder %s23, 1
      %p53 = por %p51, %p52
      %p54 = scmp.ne.s32.totalorder %s43, %s44
      %p55 = scmp.eq.s32.totalorder %s23, 0
      %p56 = por %p54, %p55
      %p57 = scmp.ne.s32.totalorder %s43, %s44
      %p58 = scmp.eq.s32.totalorder %s24, 1
      %p59 = por %p57, %p58
      %p61 = scmp.ne.s32.totalorder %s44, %s60
      %p62 = scmp.eq.s32.totalorder %s24, 0
      %p63 = por %p61, %p62
      %s65 = sadd.s32 %s64, 1
      %p68 = scmp.eq.s32.totalorder %s18, 1
      %p69 = scmp.ne.s32.totalorder %s64, %s66
      %p70 = scmp.eq.s32.totalorder %s18, 0
      %p71 = por %p69, %p70
      %p72 = scmp.ne.s32.totalorder %s64, %s66
      %p73 = scmp.eq.s32.totalorder %s23, 1
      %p74 = por %p72, %p73
      %p75 = scmp.ne.s32.totalorder %s66, %s67
      %p76 = scmp.eq.s32.totalorder %s23, 0
      %p77 = por %p75, %p76
      %p78 = scmp.ne.s32.totalorder %s66, %s67
      %p79 = scmp.eq.s32.totalorder %s24, 1
      %p80 = por %p78, %p79
      %p82 = scmp.ne.s32.totalorder %s67, %s81
      %p83 = scmp.eq.s32.totalorder %s24, 0
      %p84 = por %p82, %p83
      %s86 = sadd.s32 %s85, 1
      %p89 = scmp.eq.s32.totalorder %s18, 1
      %p90 = scmp.ne.s32.totalorder %s85, %s87
      %p91 = scmp.eq.s32.totalorder %s18, 0
      %p92 = por %p90, %p91
      %p93 = scmp.ne.s32.totalorder %s85, %s87
      %p94 = scmp.eq.s32.totalorder %s23, 1
      %p95 = por %p93, %p94
      %p96 = scmp.ne.s32.totalorder %s87, %s88
      %p97 = scmp.eq.s32.totalorder %s23, 0
      %p98 = por %p96, %p97
      %p99 = scmp.ne.s32.totalorder %s87, %s88
      %p100 = scmp.eq.s32.totalorder %s24, 1
      %p101 = por %p99, %p100
      %p103 = scmp.ne.s32.totalorder %s88, %s102
      %p104 = scmp.eq.s32.totalorder %s24, 0
      %p105 = por %p103, %p104
      %s107 = sadd.s32 %s106, 1
      %p110 = scmp.eq.s32.totalorder %s18, 1
      %p111 = scmp.ne.s32.totalorder %s106, %s108
      %p112 = scmp.eq.s32.totalorder %s18, 0
      %p113 = por %p111, %p112
      %p114 = scmp.ne.s32.totalorder %s106, %s108
      %p115 = scmp.eq.s32.totalorder %s23, 1
      %p116 = por %p114, %p115
      %p117 = scmp.ne.s32.totalorder %s108, %s109
      %p118 = scmp.eq.s32.totalorder %s23, 0
      %p119 = por %p117, %p118
      %p120 = scmp.ne.s32.totalorder %s108, %s109
      %p121 = scmp.eq.s32.totalorder %s24, 1
      %p122 = por %p120, %p121
      %p124 = scmp.ne.s32.totalorder %s109, %s123
      %p125 = scmp.eq.s32.totalorder %s24, 0
      %p126 = por %p124, %p125
      %s128 = sadd.s32 %s127, 1
      %p131 = scmp.eq.s32.totalorder %s18, 1
      %p132 = scmp.ne.s32.totalorder %s127, %s129
      %p133 = scmp.eq.s32.totalorder %s18, 0
      %p134 = por %p132, %p133
      %p135 = scmp.ne.s32.totalorder %s127, %s129
      %p136 = scmp.eq.s32.totalorder %s23, 1
      %p137 = por %p135, %p136
      %p138 = scmp.ne.s32.totalorder %s129, %s130
      %p139 = scmp.eq.s32.totalorder %s23, 0
      %p140 = por %p138, %p139
      %p141 = scmp.ne.s32.totalorder %s129, %s130
      %p142 = scmp.eq.s32.totalorder %s24, 1
      %p143 = por %p141, %p142
      %p145 = scmp.ne.s32.totalorder %s130, %s144
      %p146 = scmp.eq.s32.totalorder %s24, 0
      %p147 = por %p145, %p146
      %s148 = ssub.s32 %s26, %s33
      %p149 = scmp.eq.s32.totalorder %s148, 0
      %s151 = sadd.s32 %s150, 1
      %s152 = scalar_select %p149, %s150, %s151
      %p155 = pneg %p149
      %p156 = scmp.eq.s32.totalorder %s18, 1
      %p157 = por %p155, %p156
      %p158 = scmp.ne.s32.totalorder %s150, %s153
      %p159 = scmp.eq.s32.totalorder %s18, 0
      %p160 = por %p158, %p159
      %p161 = scmp.ne.s32.totalorder %s150, %s153
      %p162 = scmp.eq.s32.totalorder %s23, 1
      %p163 = por %p161, %p162
      %p164 = scmp.ne.s32.totalorder %s153, %s154
      %p165 = scmp.eq.s32.totalorder %s23, 0
      %p166 = por %p164, %p165
      %p167 = scmp.ne.s32.totalorder %s153, %s154
      %p168 = scmp.eq.s32.totalorder %s24, 1
      %p169 = por %p167, %p168
      %p171 = scmp.ne.s32.totalorder %s154, %s170
      %p172 = scmp.eq.s32.totalorder %s24, 0
      %p173 = por %p171, %p172
      %s174 = ssub.s32 %s26, %s33
      %p175 = scmp.eq.s32.totalorder %s174, 0
      %s177 = sadd.s32 %s176, 1
      %s178 = scalar_select %p175, %s176, %s177
      %p181 = pneg %p175
      %p182 = scmp.eq.s32.totalorder %s18, 1
      %p183 = por %p181, %p182
      %p184 = scmp.ne.s32.totalorder %s176, %s179
      %p185 = scmp.eq.s32.totalorder %s18, 0
      %p186 = por %p184, %p185
      %p187 = scmp.ne.s32.totalorder %s176, %s179
      %p188 = scmp.eq.s32.totalorder %s23, 1
      %p189 = por %p187, %p188
      %p190 = scmp.ne.s32.totalorder %s179, %s180
      %p191 = scmp.eq.s32.totalorder %s23, 0
      %p192 = por %p190, %p191
      %p193 = scmp.ne.s32.totalorder %s179, %s180
      %p194 = scmp.eq.s32.totalorder %s24, 1
      %p195 = por %p193, %p194
      %p197 = scmp.ne.s32.totalorder %s180, %s196
      %p198 = scmp.eq.s32.totalorder %s24, 0
      %p199 = por %p197, %p198
      %s200 = ssub.s32 %s25, %s37
      %s201 = ssub.s32 %s26, %s33
      %s202 = sor.u32 %s200, %s201
      %p203 = scmp.eq.s32.totalorder %s202, 0
      %s205 = sadd.s32 %s204, 1
      %s206 = scalar_select %p203, %s204, %s205
      %p209 = pneg %p203
      %p210 = scmp.eq.s32.totalorder %s18, 1
      %p211 = por %p209, %p210
      %p212 = scmp.ne.s32.totalorder %s204, %s207
      %p213 = scmp.eq.s32.totalorder %s18, 0
      %p214 = por %p212, %p213
      %p215 = scmp.ne.s32.totalorder %s204, %s207
      %p216 = scmp.eq.s32.totalorder %s23, 1
      %p217 = por %p215, %p216
      %p218 = scmp.ne.s32.totalorder %s207, %s208
      %p219 = scmp.eq.s32.totalorder %s23, 0
      %p220 = por %p218, %p219
      %p221 = scmp.ne.s32.totalorder %s207, %s208
      %p222 = scmp.eq.s32.totalorder %s24, 1
      %p223 = por %p221, %p222
      %p225 = scmp.ne.s32.totalorder %s208, %s224
      %p226 = scmp.eq.s32.totalorder %s24, 0
      %p227 = por %p225, %p226
      %p228 = scmp.le.s32.totalorder 1, %s18
      %p229 = scmp.lt.s32.totalorder %s18, 3
      %p230 = pnand %p228, %p229
      %p231 = pneg %p230
      // Predicated region
      $region9: #{tpu_custom_call.1} parent=5 // pred_check
        _
      $region10: #{tpu_custom_call.1} parent=5 // pred_check_branch
        %233 = sbr.rel (%p230) target = $region12
      $region11: #{tpu_custom_call.1} parent=5 // pred_region
        %s234 = ssub.s32 %s18, 1
        // Predicated region
        $region13: #{tpu_custom_call.1} parent=11 // pred_check
          %p235 = pneg %p77
        $region14: #{tpu_custom_call.1} parent=11 // pred_check_branch
          %237 = sbr.rel (%p235) target = $region16
        $region15: #{tpu_custom_call.1} parent=11 // pred_region
          _
        $region16: #{tpu_custom_call.1} parent=11 // pred_fallthru
          _
        // Predicated region
        $region17: #{tpu_custom_call.1} parent=11 // pred_check
          %p238 = pneg %p98
        $region18: #{tpu_custom_call.1} parent=11 // pred_check_branch
          %240 = sbr.rel (%p238) target = $region20
        $region19: #{tpu_custom_call.1} parent=11 // pred_region
          _
        $region20: #{tpu_custom_call.1} parent=11 // pred_fallthru
          _
        // Predicated region
        $region21: #{tpu_custom_call.1} parent=11 // pred_check
          %p241 = pneg %p119
        $region22: #{tpu_custom_call.1} parent=11 // pred_check_branch
          %243 = sbr.rel (%p241) target = $region24
        $region23: #{tpu_custom_call.1} parent=11 // pred_region
          %s245 = ssub.s32 512, 512
          %246 = vsyncadd [#allocation4], %s245
          %s247 = sshll.u32 [#allocation3], 4
          %s248 = int_to_ptr.vmem [resolvable:$true] %s247
          %253 = dma.hbm_to_vmem [thread:$0]  %s3, 512, %s248, [#allocation4], 128, 128, 8
        $region24: #{tpu_custom_call.1} parent=11 // pred_fallthru
          _
        // Predicated region
        $region25: #{tpu_custom_call.1} parent=11 // pred_check
          %p254 = pneg %p140
        $region26: #{tpu_custom_call.1} parent=11 // pred_check_branch
          %256 = sbr.rel (%p254) target = $region28
        $region27: #{tpu_custom_call.1} parent=11 // pred_region
          _
        $region28: #{tpu_custom_call.1} parent=11 // pred_fallthru
          _
        // Predicated region
        $region29: #{tpu_custom_call.1} parent=11 // pred_check
          %p257 = pneg %p166
        $region30: #{tpu_custom_call.1} parent=11 // pred_check_branch
          %259 = sbr.rel (%p257) target = $region32
        $region31: #{tpu_custom_call.1} parent=11 // pred_region
          %s261 = ssub.s32 2048, 2048
          %262 = vsyncadd [#allocation7], %s261
          %s263 = smul.addr %s28, 128
          %s264 = scalar_lea.hbm %s5, %s263
          %s265 = sshll.u32 [#allocation6], 4
          %s266 = int_to_ptr.vmem [resolvable:$true] %s265
          %271 = dma.hbm_to_vmem [thread:$0]  %s264, 2048, %s266, [#allocation7], 128, 128, 8
        $region32: #{tpu_custom_call.1} parent=11 // pred_fallthru
          _
        // Predicated region
        $region33: #{tpu_custom_call.1} parent=11 // pred_check
          %p272 = pneg %p192
        $region34: #{tpu_custom_call.1} parent=11 // pred_check_branch
          %274 = sbr.rel (%p272) target = $region36
        $region35: #{tpu_custom_call.1} parent=11 // pred_region
          %p275 = scmp.lt.s32.totalorder %s28, 0
          %s276 = scalar_select %p275, %s28, 0
          %s277 = scalar_lea.vmem %s6, %s276
        $region36: #{tpu_custom_call.1} parent=11 // pred_fallthru
          _
      $region12: #{tpu_custom_call.1} parent=5 // pred_fallthru
        _
      %p278 = scmp.lt.s32.totalorder %s18, 2
      // Predicated region
      $region37: #{tpu_custom_call.1} parent=5 // pred_check
        %p279 = pneg %p278
      $region38: #{tpu_custom_call.1} parent=5 // pred_check_branch
        %281 = sbr.rel (%p279) target = $region40
      $region39: #{tpu_custom_call.1} parent=5 // pred_region
        // Predicated region
        $region41: #{tpu_custom_call.1} parent=39 // pred_check
          %p282 = pneg %p50
        $region42: #{tpu_custom_call.1} parent=39 // pred_check_branch
          %284 = sbr.rel (%p282) target = $region44
        $region43: #{tpu_custom_call.1} parent=39 // pred_region
          %p285 = scmp.lt.s32.totalorder %s25, 1
          %s286 = scalar_select %p285, %s25, 1
          %s287 = smul.addr %s286, 8
          %s288 = scalar_lea.vmem %s0, %s287
        $region44: #{tpu_custom_call.1} parent=39 // pred_fallthru
          _
      $region40: #{tpu_custom_call.1} parent=5 // pred_fallthru
        _
      %p289 = scmp.le.s32.totalorder 1, %s18
      %p290 = scmp.lt.s32.totalorder %s18, 3
      %p291 = pnand %p289, %p290
      %p292 = pneg %p291
      // Predicated region
      $region45: #{tpu_custom_call.1} parent=5 // pred_check
        _
      $region46: #{tpu_custom_call.1} parent=5 // pred_check_branch
        %294 = sbr.rel (%p291) target = $region48
      $region47: #{tpu_custom_call.1} parent=5 // pred_region
        %s295 = ssub.s32 %s18, 1
        // Predicated region
        $region49: #{tpu_custom_call.1} parent=47 // pred_check
          %p296 = pneg %p119
        $region50: #{tpu_custom_call.1} parent=47 // pred_check_branch
          %298 = sbr.rel (%p296) target = $region52
        $region51: #{tpu_custom_call.1} parent=47 // pred_region
          %299 = dma.done [#allocation4], 512
        $region52: #{tpu_custom_call.1} parent=47 // pred_fallthru
          _
        // Predicated region
        $region53: #{tpu_custom_call.1} parent=47 // pred_check
          %p300 = pneg %p166
        $region54: #{tpu_custom_call.1} parent=47 // pred_check_branch
          %302 = sbr.rel (%p300) target = $region56
        $region55: #{tpu_custom_call.1} parent=47 // pred_region
          %303 = dma.done [#allocation7], 2048
        $region56: #{tpu_custom_call.1} parent=47 // pred_fallthru
          _
        %p304 = scmp.lt.s32.totalorder %s27, 1
        %s305 = scalar_select %p304, %s27, 1
        %s306 = smul.addr %s305, 8
        %s307 = scalar_lea.vmem %s0, %s306
        %p308 = pneg %p56
        %p309 = pneg %p53
        %p310 = pneg %p77
        %p311 = pneg %p74
        %p312 = pneg %p98
        %p313 = pneg %p95
        %p314 = pneg %p119
        %p315 = pneg %p116
        %p316 = pneg %p140
        %p317 = pneg %p137
        %p318 = pneg %p166
        %p319 = pneg %p163
        %p320 = scmp.lt.s32.totalorder %s28, 0
        %s321 = scalar_select %p320, %s28, 0
        %s322 = scalar_lea.vmem %s6, %s321
        %p323 = pneg %p192
        %p324 = pneg %p189
        %p325 = pneg %p220
        %p326 = pneg %p217
        %s327 = sand.u32 %s207, 1
        %s328 = scalar_lea.sflag [#allocation5], %s327
        %s329 = sand.u32 %s207, 1
        %s330 = smul.addr %s329, 8
        %s331 = scalar_lea.vmem [#allocation8], %s330
        %p332 = scmp.lt.s32.totalorder %s27, 1
        %s333 = scalar_select %p332, %s27, 1
        %s334 = smul.addr %s333, 8
        %s335 = scalar_lea.vmem %s0, %s334
        %p336 = scmp.lt.s32.totalorder %s28, 0
        %s337 = scalar_select %p336, %s28, 0
        %s338 = scalar_lea.vmem %s6, %s337
        %p339 = scmp.eq.s32.totalorder %s28, 0
        // Predicated region
        $region57: #{tpu_custom_call.1} parent=47 // pred_check
          %p340 = pneg %p339
        $region58: #{tpu_custom_call.1} parent=47 // pred_check_branch
          %342 = sbr.rel (%p340) target = $region60
        $region59: #{tpu_custom_call.1} parent=47 // pred_region
          %v343 = vld [vmem:[%s335] sm:$0xff]
          %v344 = vld [vmem:[%s1] sm:$0x3]
          %346 = vset.pattern.permute.xlu0 0
          %347 = vperm.xlu0 %346, %v343
          %v348 = vpop.permute.xlu0 %347
          %v350 = vlaneseq
          %v351 = vshrl.u32 %v350, 7
          %v352 = vsub.s32 0, %v351
          %v353 = vrot.slane %v344, %v352
          %v354 = vmul.f32 %v348, %v353
          %355 = vset.pattern.permute.xlu0 1
          %356 = vperm.xlu0 %355, %v343
          %v357 = vpop.permute.xlu0 %356
          %v359 = vlaneseq
          %v360 = vshrl.u32 %v359, 7
          %v361 = vsub.s32 1, %v360
          %v362 = vrot.slane %v344, %v361
          %v363 = vmul.f32 %v357, %v362
          %v364 = vadd.f32 %v354, %v363
          %v365 = vld [vmem:[%s2] sm:$0x1]
          %v367 = vlaneseq
          %v368 = vshrl.u32 %v367, 7
          %v369 = vsub.s32 0, %v368
          %v370 = vrot.slane %v365, %v369
          %v372 = vadd.f32 %v364, %v370
          %v373 = vand.u32 2147483647, %v372
          %vm374 = vcmp.le.f32.partialorder %v373, 0.7853982
          %vm375 = vcmp.lt.s32.totalorder %v372, 0
          %v376 = vand.u32 %v372, 2139095040
          %v377 = vshrl.u32 %v376, 23
          %v378 = vsub.s32 %v377, 127
          %v379 = vand.u32 2147483647, %v372
          %v380 = vand.u32 %v379, 8388607
          %v381 = vor.u32 %v380, 8388608
          %v382 = vsub.s32 0, %v381
          %v383 = vadd.s32 %v378, 1
          %vm384 = vcmp.gt.s32.totalorder %v383, 0
          %v385 = vsel %vm384, %v383, 0
          %v386 = vshrl.u32 %v385, 5
          %v387 = vand.u32 %v385, 31
          %v388 = vsub.s32 32, %v387
          %v389 = vshrl.u32 683565275, %v388
          %v390 = vshll.u32 683565275, %v387
          %v391 = vshrl.u32 2475754826, %v388
          %v392 = vor.u32 %v390, %v391
          %v393 = vshll.u32 2475754826, %v387
          %v394 = vshrl.u32 2131351028, %v388
          %v395 = vor.u32 %v393, %v394
          %v396 = vshll.u32 2131351028, %v387
          %v397 = vshrl.u32 2102212464, %v388
          %v398 = vor.u32 %v396, %v397
          %v399 = vshll.u32 2102212464, %v387
          %v400 = vshrl.u32 920167782, %v388
          %v401 = vor.u32 %v399, %v400
          %v402 = vshll.u32 920167782, %v387
          %v403 = vshrl.u32 1326507024, %v388
          %v404 = vor.u32 %v402, %v403
          %vm405 = vcmp.lt.s32.totalorder %v386, 1
          %vm406 = vcmp.lt.s32.totalorder %v386, 2
          %vm407 = vcmp.lt.s32.totalorder %v386, 3
          %vm408 = vcmp.lt.s32.totalorder %v386, 4
          %v409 = vsel %vm405, %v389, %v392
          %v410 = vsel %vm408, %v398, 2102212464
          %v411 = vsel %vm407, %v395, %v410
          %v412 = vsel %vm406, %v409, %v411
          %v413 = vsel %vm405, %v392, %v395
          %v414 = vsel %vm408, %v401, 920167782
          %v415 = vsel %vm407, %v398, %v414
          %v416 = vsel %vm406, %v413, %v415
          %v417 = vsel %vm405, %v395, %v398
          %v418 = vsel %vm408, %v404, 1326507024
          %v419 = vsel %vm407, %v401, %v418
          %v420 = vsel %vm406, %v417, %v419
          %v421 = vshll.u32 %v381, 8
          %v422 = vmul.u32.u64.compose %v421, %v420
          %v423 = vextract.low.u32 %v422
          %v424 = vextract.high.u32 %v422
          %v425 = vmul.u32.u64.compose %v421, %v416
          %v426 = vextract.low.u32 %v425
          %v427 = vextract.high.u32 %v425
          %v428 = vmul.u32 %v421, %v412
          %v429 = vadd.s32 %v424, %v426
          %vm430 = vc.u32 %v424, %v426
          %v431 = vadd.s32 %v427, 1
          %v432 = vsel %vm430, %v431, %v427
          %v433 = vadd.s32 %v428, %v432
          %v434 = vadd.s32 %v433, 536870912
          %v435 = vshrl.u32 %v434, 30
          %v436 = vshll.u32 %v435, 30
          %v437 = vsub.s32 %v433, %v436
          %vm438 = vcmp.lt.s32.totalorder %v437, 0
          %v439 = vsub.s32 0, %v437
          %v440 = vsel %vm438, %v439, %v437
          %v441 = vclz %v440
          %v442 = vsub.s32 %v441, 2
          %vm443 = vcmp.gt.s32.totalorder 0, %v442
          %v444 = vsel %vm443, 0, %v442
          %v445 = vsub.s32 32, %v444
          %v446 = vshll.u32 %v437, %v444
          %v447 = vshrl.u32 %v429, %v445
          %v448 = vor.u32 %v446, %v447
          %v449 = vsub.s32 4294967266, %v444
          %v450 = vadd.s32 %v449, 127
          %v451 = vshll.u32 %v450, 23
          %v452 = vor.u32 4788187, %v451
          %v453 = vand.u32 2147483647, %v452
          %v455 = vcvt.s32.f32 %v448
          %v456 = vmul.f32 %v455, %v453
          %v457 = vxor.u32 %v456, 2147483648
          %v458 = vsel %vm375, %v457, %v456
          %v459 = vsub.s32 4, %v435
          %v460 = vsel %vm375, %v459, %v435
          %v461 = vsel %vm374, %v372, %v458
          %v462 = vsel %vm374, 0, %v460
          %v463 = vcosq.f32.pop %v461
          %v464 = vsinq.f32.pop %v461
          %vm465 = vweird.f32 %v372
          %v466 = vadd.s32 %v462, 3
          %v467 = vand.u32 %v466, 3
          %vm468 = vcmp.lt.s32.totalorder %v467, 2
          %vm469 = vcmp.eq.s32.totalorder %v467, 0
          %v470 = vxor.u32 %v464, 2147483648
          %v471 = vsel %vm469, %v463, %v470
          %vm472 = vcmp.eq.s32.totalorder %v467, 2
          %v473 = vxor.u32 %v463, 2147483648
          %v474 = vsel %vm472, %v473, %v464
          %v475 = vsel %vm468, %v471, %v474
          %v476 = vsel %vm465, nan, %v475
          %v477 = vld [vmem:[#allocation3] sm:$0xff]
          %v478 = vld [vmem:[#allocation3 + $0x8] sm:$0xff]
          %v479 = vld [vmem:[#allocation3 + $0x10] sm:$0xff]
          %v480 = vld [vmem:[#allocation3 + $0x18] sm:$0xff]
          %v481 = vld [vmem:[%s4] sm:$0x1]
          %v483 = vlaneseq
          %v484 = vshrl.u32 %v483, 7
          %v485 = vsub.s32 0, %v484
          %v486 = vrot.slane %v481, %v485
          %vm488 = vcmask 261120
          %v490 = vsel %vm488, %v476, 0
          %492 = vmatprep.subr.mxu0 0.0
          %493 = vmatpush1.msra.mxu0 %v477
          %494 = vmatprep.subr.mxu0 0.0
          %495 = vmatpush1.msra.mxu0 %v478
          %496 = vmatprep.subr.mxu0 0.0
          %497 = vmatpush1.msra.mxu0 %v479
          %498 = vmatprep.subr.mxu0 0.0
          %499 = vmatpush1.msra.mxu0 %v480
          %500 = vmatprep.subr.mxu0 0.0
          %501 = vmatpush1.msra.mxu0 0.0
          %502 = vmatprep.subr.mxu0 0.0
          %503 = vmatpush1.msra.mxu0 0.0
          %504 = vmatprep.subr.mxu0 0.0
          %505 = vmatpush1.msra.mxu0 0.0
          %506 = vmatprep.subr.mxu0 0.0
          %507 = vmatpush1.msra.mxu0 0.0
          %508 = vmatprep.subr.mxu0 0.0
          %509 = vmatpush1.msra.mxu0 0.0
          %510 = vmatprep.subr.mxu0 0.0
          %511 = vmatpush1.msra.mxu0 0.0
          %512 = vmatprep.subr.mxu0 0.0
          %513 = vmatpush1.msra.mxu0 0.0
          %514 = vmatprep.subr.mxu0 0.0
          %515 = vmatpush1.msra.mxu0 0.0
          %516 = vmatprep.subr.mxu0 0.0
          %517 = vmatpush1.msra.mxu0 0.0
          %518 = vmatprep.subr.mxu0 0.0
          %519 = vmatpush1.msra.mxu0 0.0
          %520 = vmatprep.subr.mxu0 0.0
          %521 = vmatpush1.msra.mxu0 0.0
          %522 = vmatprep.subr.mxu0 0.0
          %523 = vmatpush1.msra.mxu0 0.0
          %524 = vmatprep.subr.mxu0 0.0
          %525 = vmatpush1.msra.mxu0 0.0
          %526 = vmatprep.subr.mxu0 0.0
          %527 = vmatpush1.msra.mxu0 0.0
          %528 = vmatprep.subr.mxu0 0.0
          %529 = vmatpush1.msra.mxu0 0.0
          %530 = vmatprep.subr.mxu0 0.0
          %531 = vmatpush1.msra.mxu0 0.0
          %532 = vmatprep.subr.mxu0 0.0
          %533 = vmatpush1.msra.mxu0 0.0
          %534 = vmatprep.subr.mxu0 0.0
          %535 = vmatpush1.msra.mxu0 0.0
          %536 = vmatprep.subr.mxu0 0.0
          %537 = vmatpush1.msra.mxu0 0.0
          %538 = vmatprep.subr.mxu0 0.0
          %539 = vmatpush1.msra.mxu0 0.0
          %540 = vmatprep.subr.mxu0 0.0
          %541 = vmatpush1.msra.mxu0 0.0
          %542 = vmatprep.subr.mxu0 0.0
          %543 = vmatpush1.msra.mxu0 0.0
          %544 = vmatprep.subr.mxu0 0.0
          %545 = vmatpush1.msra.mxu0 0.0
          %546 = vmatprep.subr.mxu0 0.0
          %547 = vmatpush1.msra.mxu0 0.0
          %548 = vmatprep.subr.mxu0 0.0
          %549 = vmatpush1.msra.mxu0 0.0
          %550 = vmatprep.subr.mxu0 0.0
          %551 = vmatpush1.msra.mxu0 0.0
          %552 = vmatprep.subr.mxu0 0.0
          %553 = vmatpush1.msra.mxu0 0.0
          %554 = vmatprep.subr.mxu0 0.0
          %555 = vmatpush1.msra.mxu0 0.0
          %556 = vmatprep.mubr.f32.mxu0 0.0
          %557 = vmatmul.mubr.f32.gmra.mrb[0].mxu0 %v490
          %v558 = vpop.f32.mrb[0].mxu0
          %v559 = vadd.f32 %v486, %v558
          %v560 = vpop.f32.mrb[0].mxu0
          %561 = vdwg.mxu0
          %v562 = vmul.f32 %v559, 0.5
          %v563 = vmul.f32 %v559, 0.70710677
          %v564 = verf.f32.pop %v563
          %v565 = vadd.f32 %v564, 1.0
          %v566 = vmul.f32 %v562, %v565
          %567 = vst [vmem:[#allocation2] sm:$0xff] %v566
        $region60: #{tpu_custom_call.1} parent=47 // pred_fallthru
          _
        %v568 = vld [vmem:[#allocation2] sm:$0xff]
        %v569 = vld [vmem:[#allocation6] sm:$0xff]
        %v570 = vld [vmem:[#allocation6 + $0x8] sm:$0xff]
        %v571 = vld [vmem:[#allocation6 + $0x10] sm:$0xff]
        %v572 = vld [vmem:[#allocation6 + $0x18] sm:$0xff]
        %v573 = vld [vmem:[#allocation6 + $0x20] sm:$0xff]
        %v574 = vld [vmem:[#allocation6 + $0x28] sm:$0xff]
        %v575 = vld [vmem:[#allocation6 + $0x30] sm:$0xff]
        %v576 = vld [vmem:[#allocation6 + $0x38] sm:$0xff]
        %v577 = vld [vmem:[#allocation6 + $0x40] sm:$0xff]
        %v578 = vld [vmem:[#allocation6 + $0x48] sm:$0xff]
        %v579 = vld [vmem:[#allocation6 + $0x50] sm:$0xff]
        %v580 = vld [vmem:[#allocation6 + $0x58] sm:$0xff]
        %v581 = vld [vmem:[#allocation6 + $0x60] sm:$0xff]
        %v582 = vld [vmem:[#allocation6 + $0x68] sm:$0xff]
        %v583 = vld [vmem:[#allocation6 + $0x70] sm:$0xff]
        %v584 = vld [vmem:[#allocation6 + $0x78] sm:$0xff]
        %v585 = vld [vmem:[%s338] sm:$0x1]
        %v587 = vlaneseq
        %v588 = vshrl.u32 %v587, 7
        %v589 = vsub.s32 0, %v588
        %v590 = vrot.slane %v585, %v589
        %592 = vmatprep.subr.mxu0 0.0
        %593 = vmatpush1.msra.mxu0 %v569
        %594 = vmatprep.subr.mxu0 0.0
        %595 = vmatpush1.msra.mxu0 %v570
        %596 = vmatprep.subr.mxu0 0.0
        %597 = vmatpush1.msra.mxu0 %v571
        %598 = vmatprep.subr.mxu0 0.0
        %599 = vmatpush1.msra.mxu0 %v572
        %600 = vmatprep.subr.mxu0 0.0
        %601 = vmatpush1.msra.mxu0 %v573
        %602 = vmatprep.subr.mxu0 0.0
        %603 = vmatpush1.msra.mxu0 %v574
        %604 = vmatprep.subr.mxu0 0.0
        %605 = vmatpush1.msra.mxu0 %v575
        %606 = vmatprep.subr.mxu0 0.0
        %607 = vmatpush1.msra.mxu0 %v576
        %608 = vmatprep.subr.mxu0 0.0
        %609 = vmatpush1.msra.mxu0 %v577
        %610 = vmatprep.subr.mxu0 0.0
        %611 = vmatpush1.msra.mxu0 %v578
        %612 = vmatprep.subr.mxu0 0.0
        %613 = vmatpush1.msra.mxu0 %v579
        %614 = vmatprep.subr.mxu0 0.0
        %615 = vmatpush1.msra.mxu0 %v580
        %616 = vmatprep.subr.mxu0 0.0
        %617 = vmatpush1.msra.mxu0 %v581
        %618 = vmatprep.subr.mxu0 0.0
        %619 = vmatpush1.msra.mxu0 %v582
        %620 = vmatprep.subr.mxu0 0.0
        %621 = vmatpush1.msra.mxu0 %v583
        %622 = vmatprep.subr.mxu0 0.0
        %623 = vmatpush1.msra.mxu0 %v584
        %624 = vmatprep.subr.mxu0 0.0
        %625 = vmatpush1.msra.mxu0 0.0
        %626 = vmatprep.subr.mxu0 0.0
        %627 = vmatpush1.msra.mxu0 0.0
        %628 = vmatprep.subr.mxu0 0.0
        %629 = vmatpush1.msra.mxu0 0.0
        %630 = vmatprep.subr.mxu0 0.0
        %631 = vmatpush1.msra.mxu0 0.0
        %632 = vmatprep.subr.mxu0 0.0
        %633 = vmatpush1.msra.mxu0 0.0
        %634 = vmatprep.subr.mxu0 0.0
        %635 = vmatpush1.msra.mxu0 0.0
        %636 = vmatprep.subr.mxu0 0.0
        %637 = vmatpush1.msra.mxu0 0.0
        %638 = vmatprep.subr.mxu0 0.0
        %639 = vmatpush1.msra.mxu0 0.0
        %640 = vmatprep.subr.mxu0 0.0
        %641 = vmatpush1.msra.mxu0 0.0
        %642 = vmatprep.subr.mxu0 0.0
        %643 = vmatpush1.msra.mxu0 0.0
        %644 = vmatprep.subr.mxu0 0.0
        %645 = vmatpush1.msra.mxu0 0.0
        %646 = vmatprep.subr.mxu0 0.0
        %647 = vmatpush1.msra.mxu0 0.0
        %648 = vmatprep.subr.mxu0 0.0
        %649 = vmatpush1.msra.mxu0 0.0
        %650 = vmatprep.subr.mxu0 0.0
        %651 = vmatpush1.msra.mxu0 0.0
        %652 = vmatprep.subr.mxu0 0.0
        %653 = vmatpush1.msra.mxu0 0.0
        %654 = vmatprep.subr.mxu0 0.0
        %655 = vmatpush1.msra.mxu0 0.0
        %656 = vmatprep.mubr.f32.mxu0 0.0
        %657 = vmatmul.mubr.f32.gmra.mrb[0].mxu0 %v568
        %v658 = vpop.f32.mrb[0].mxu0
        %v659 = vadd.f32 %v590, %v658
        %v660 = vpop.f32.mrb[0].mxu0
        %661 = vdwg.mxu0
        %662 = vst [vmem:[%s331] sm:$0xff] %v659
        %s663 = sand.u32 %s207, 1
        %s664 = scalar_lea.sflag [#allocation5], %s663
        %s665 = sand.u32 %s207, 1
        %s666 = smul.addr %s665, 8
        %s667 = scalar_lea.vmem [#allocation8], %s666
        // Predicated region
        $region61: #{tpu_custom_call.1} parent=47 // pred_check
          %p668 = pneg %p217
        $region62: #{tpu_custom_call.1} parent=47 // pred_check_branch
          %670 = sbr.rel (%p668) target = $region64
        $region63: #{tpu_custom_call.1} parent=47 // pred_region
          %s672 = ssub.s32 128, 128
          %673 = vsyncadd %s664, %s672
          %s674 = sadd.s32 %s28, %s27
          %s675 = smul.addr %s674, 128
          %s676 = scalar_lea.hbm %s7, %s675
          %s678 = sshll.u32 %s667, 4
          %s679 = int_to_ptr.vmem [resolvable:$true] %s678
          %681 = dma.vmem_to_hbm [thread:$0]  %s679, 128, %s676, %s664
        $region64: #{tpu_custom_call.1} parent=47 // pred_fallthru
          _
      $region48: #{tpu_custom_call.1} parent=5 // pred_fallthru
        _
      %p682 = scmp.le.s32.totalorder 2, %s18
      // Predicated region
      $region65: #{tpu_custom_call.1} parent=5 // pred_check
        %p683 = pneg %p682
      $region66: #{tpu_custom_call.1} parent=5 // pred_check_branch
        %685 = sbr.rel (%p683) target = $region68
      $region67: #{tpu_custom_call.1} parent=5 // pred_region
        %s686 = ssub.s32 %s18, 2
        // Predicated region
        $region69: #{tpu_custom_call.1} parent=67 // pred_check
          %p687 = pneg %p223
        $region70: #{tpu_custom_call.1} parent=67 // pred_check_branch
          %689 = sbr.rel (%p687) target = $region72
        $region71: #{tpu_custom_call.1} parent=67 // pred_region
          %s690 = sand.u32 %s208, 1
          %s691 = scalar_lea.sflag [#allocation5], %s690
          %s692 = sand.u32 %s208, 1
          %s693 = smul.addr %s692, 8
          %s694 = scalar_lea.vmem [#allocation8], %s693
          %695 = dma.done %s691, 128
        $region72: #{tpu_custom_call.1} parent=67 // pred_fallthru
          _
      $region68: #{tpu_custom_call.1} parent=5 // pred_fallthru
        _
    $region6: #{tpu_custom_call.1} parent=1 // loop_footer
      %s22 = sadd.s32 1, %s18
    $region7: #{tpu_custom_call.1} parent=1 // loop_footer_branch
      %17 = sbr.rel target = $region3
    $region8: #{tpu_custom_call.1} parent=1 // loop_exit
      _
    %696 = vsyncpa [#allocation4], 1
    %s697 = scalar_lea.sflag [#allocation4], 1
    %698 = vsyncpa %s697, 1
    %699 = vsyncpa [#allocation7], 1
    %700 = vsyncpa [#allocation5], 1
    %s701 = scalar_lea.sflag [#allocation5], 1
    %702 = vsyncpa %s701, 1

</llo_original>
